<compile_context>
chip_gen: v6e
topology: v6e:2x2x1
jax: 0.10.0
libtpu: 0.0.40
codegen_flags: <defaults>
</compile_context>

<pallas_src>
import functools
import math

import jax
import jax.numpy as jnp
from jax import lax
from jax.experimental import pallas as pl
from jax.experimental.pallas import tpu as pltpu


def _round_up(x, m):
    return (x + m - 1) // m * m


# ----------------------------------------------------------------------
# Pallas kernels
# ----------------------------------------------------------------------

def _matmul_stats_kernel(x_ref, w_ref, o_ref, sum_ref, ssq_ref, acc_ref):
    """bf16 x bf16 -> f32 accumulate; epilogue writes the bf16 output tile plus
    per-column sum and sum-of-squares partials (for fused BatchNorm stats)."""
    @pl.when(pl.program_id(2) == 0)
    def _():
        acc_ref[...] = jnp.zeros_like(acc_ref)

    acc_ref[...] += jnp.dot(x_ref[...], w_ref[...],
                            preferred_element_type=jnp.float32)

    @pl.when(pl.program_id(2) == pl.num_programs(2) - 1)
    def _():
        acc = acc_ref[...]
        o_ref[...] = acc.astype(o_ref.dtype)
        tn = acc.shape[1]
        s = jnp.sum(acc, axis=0, keepdims=True)
        ss = jnp.sum(acc * acc, axis=0, keepdims=True)
        # Stats blocks are (1, 8, tn); broadcast over the 8 sublanes so the store
        # stays tile-aligned.  Only row 0 is consumed outside.
        sum_ref[0] = jnp.broadcast_to(s, (8, tn))
        ssq_ref[0] = jnp.broadcast_to(ss, (8, tn))


def _matmul_bias_kernel(x_ref, w_ref, b_ref, o_ref, acc_ref):
    """bf16 x bf16 + bias -> f32 output (used only for the final 1x1 OutConv)."""
    @pl.when(pl.program_id(2) == 0)
    def _():
        acc_ref[...] = jnp.zeros_like(acc_ref)

    acc_ref[...] += jnp.dot(x_ref[...], w_ref[...],
                            preferred_element_type=jnp.float32)

    @pl.when(pl.program_id(2) == pl.num_programs(2) - 1)
    def _():
        o_ref[...] = (acc_ref[...] + b_ref[...]).astype(o_ref.dtype)


def _make_affine_kernel(has_res, do_relu):
    """out = [relu]( x * scale + shift [+ residual] ); x/residual bf16, scale/shift f32."""
    if has_res:
        def kernel(x_ref, r_ref, s_ref, t_ref, o_ref):
            v = (x_ref[...].astype(jnp.float32) * s_ref[...] + t_ref[...]
                 + r_ref[...].astype(jnp.float32))
            if do_relu:
                v = jnp.maximum(v, 0.0)
            o_ref[...] = v.astype(o_ref.dtype)
    else:
        def kernel(x_ref, s_ref, t_ref, o_ref):
            v = x_ref[...].astype(jnp.float32) * s_ref[...] + t_ref[...]
            if do_relu:
                v = jnp.maximum(v, 0.0)
            o_ref[...] = v.astype(o_ref.dtype)
    return kernel


# ----------------------------------------------------------------------
# Pallas-call wrappers
# ----------------------------------------------------------------------

def _mm_tiles(M, K, N):
    if M >= 512:
        tm = 512
    elif M >= 256:
        tm = 256
    else:
        tm = _round_up(max(M, 16), 16)          # bf16 sublane packing -> multiple of 16
    Mp = _round_up(M, tm)
    Np = _round_up(N, 128)
    tn = 512 if Np % 512 == 0 else (256 if Np % 256 == 0 else 128)
    Kp = _round_up(K, 128)
    tk = 512 if Kp % 512 == 0 else (256 if Kp % 256 == 0 else 128)
    return tm, Mp, tn, Np, tk, Kp


def _pad2(a, rows, cols):
    r = rows - a.shape[0]
    c = cols - a.shape[1]
    if r or c:
        a = jnp.pad(a, ((0, r), (0, c)))
    return a


def _conv_matmul_stats(x2d, w2d):
    """x2d: (M, K), w2d: (K, N) -> (out bf16 (M, N), col_sum f32 (N,), col_sumsq f32 (N,))."""
    M, K = x2d.shape
    N = w2d.shape[1]
    tm, Mp, tn, Np, tk, Kp = _mm_tiles(M, K, N)

    xp = _pad2(x2d.astype(jnp.bfloat16), Mp, Kp)
    wp = _pad2(w2d.astype(jnp.bfloat16), Kp, Np)
    mb = Mp // tm

    out, sums, ssqs = pl.pallas_call(
        _matmul_stats_kernel,
        out_shape=(
            jax.ShapeDtypeStruct((Mp, Np), jnp.bfloat16),
            jax.ShapeDtypeStruct((mb, 8, Np), jnp.float32),
            jax.ShapeDtypeStruct((mb, 8, Np), jnp.float32),
        ),
        grid_spec=pltpu.PrefetchScalarGridSpec(
            num_scalar_prefetch=0,
            grid=(mb, Np // tn, Kp // tk),
            in_specs=[
                pl.BlockSpec((tm, tk), lambda i, j, k: (i, k)),
                pl.BlockSpec((tk, tn), lambda i, j, k: (k, j)),
            ],
            out_specs=[
                pl.BlockSpec((tm, tn), lambda i, j, k: (i, j)),
                pl.BlockSpec((1, 8, tn), lambda i, j, k: (i, 0, j)),
                pl.BlockSpec((1, 8, tn), lambda i, j, k: (i, 0, j)),
            ],
            scratch_shapes=[pltpu.VMEM((tm, tn), jnp.float32)],
        ),
        compiler_params=pltpu.CompilerParams(
            dimension_semantics=("parallel", "parallel", "arbitrary")),
    )(xp, wp)

    col_sum = jnp.sum(sums[:, 0, :N], axis=0)
    col_ssq = jnp.sum(ssqs[:, 0, :N], axis=0)
    return out[:M, :N], col_sum, col_ssq


def _conv_matmul_bias(x2d, w2d, b):
    """x2d: (M, K), w2d: (K, N), b: (N,) -> f32 (M, N).  Final OutConv only."""
    M, K = x2d.shape
    N = w2d.shape[1]
    tm, Mp, tn, Np, tk, Kp = _mm_tiles(M, K, N)

    xp = _pad2(x2d.astype(jnp.bfloat16), Mp, Kp)
    wp = _pad2(w2d.astype(jnp.bfloat16), Kp, Np)
    bp = jnp.pad(b.astype(jnp.float32), (0, Np - N)).reshape(1, Np)

    out = pl.pallas_call(
        _matmul_bias_kernel,
        out_shape=jax.ShapeDtypeStruct((Mp, Np), jnp.float32),
        grid_spec=pltpu.PrefetchScalarGridSpec(
            num_scalar_prefetch=0,
            grid=(Mp // tm, Np // tn, Kp // tk),
            in_specs=[
                pl.BlockSpec((tm, tk), lambda i, j, k: (i, k)),
                pl.BlockSpec((tk, tn), lambda i, j, k: (k, j)),
                pl.BlockSpec((1, tn), lambda i, j, k: (0, j)),
            ],
            out_specs=pl.BlockSpec((tm, tn), lambda i, j, k: (i, j)),
            scratch_shapes=[pltpu.VMEM((tm, tn), jnp.float32)],
        ),
        compiler_params=pltpu.CompilerParams(
            dimension_semantics=("parallel", "parallel", "arbitrary")),
    )(xp, wp, bp)
    return out[:M, :N]


def _affine_act(x2d, scale, shift, residual, relu):
    """out = [relu](x2d * scale + shift [+ residual]); bf16 in/out, f32 scale/shift."""
    M, C = x2d.shape
    if M >= 1024:
        tm = 1024
    elif M >= 512:
        tm = 512
    else:
        tm = _round_up(max(M, 16), 16)
    Mp = _round_up(M, tm)
    Cp = _round_up(C, 128)
    tc = 512 if Cp % 512 == 0 else (256 if Cp % 256 == 0 else 128)

    xp = _pad2(x2d.astype(jnp.bfloat16), Mp, Cp)
    sp = jnp.pad(scale.astype(jnp.float32), (0, Cp - C)).reshape(1, Cp)
    tp = jnp.pad(shift.astype(jnp.float32), (0, Cp - C)).reshape(1, Cp)

    args = [xp]
    in_specs = [pl.BlockSpec((tm, tc), lambda i, j: (i, j))]
    if residual is not None:
        args.append(_pad2(residual.astype(jnp.bfloat16), Mp, Cp))
        in_specs.append(pl.BlockSpec((tm, tc), lambda i, j: (i, j)))
    args += [sp, tp]
    in_specs += [pl.BlockSpec((1, tc), lambda i, j: (0, j)),
                 pl.BlockSpec((1, tc), lambda i, j: (0, j))]

    out = pl.pallas_call(
        _make_affine_kernel(residual is not None, relu),
        out_shape=jax.ShapeDtypeStruct((Mp, Cp), jnp.bfloat16),
        grid_spec=pltpu.PrefetchScalarGridSpec(
            num_scalar_prefetch=0,
            grid=(Mp // tm, Cp // tc),
            in_specs=in_specs,
            out_specs=pl.BlockSpec((tm, tc), lambda i, j: (i, j)),
        ),
        compiler_params=pltpu.CompilerParams(
            dimension_semantics=("parallel", "parallel")),
    )(*args)
    return out[:M, :C]


# ----------------------------------------------------------------------
# NN building blocks
# ----------------------------------------------------------------------

def _im2col_3x3(x, stride):
    """x: (N, H, W, Cin) -> patches (N*Ho*Wo, 9*Cin), padding=1."""
    n, h, wd, cin = x.shape
    ho = (h + 2 - 3) // stride + 1
    wo = (wd + 2 - 3) // stride + 1
    xp = jnp.pad(x, ((0, 0), (1, 1), (1, 1), (0, 0)))
    cols = []
    for ky in range(3):
        for kx in range(3):
            cols.append(xp[:, ky:ky + stride * (ho - 1) + 1:stride,
                           kx:kx + stride * (wo - 1) + 1:stride, :])
    patches = jnp.concatenate(cols, axis=-1).reshape(n * ho * wo, 9 * cin)
    return patches, ho, wo


@functools.partial(jax.jit, static_argnames=("stride", "relu"))
def conv_bn_act(x, w, bn, stride=1, residual=None, relu=True, eps=1e-5):
    """Conv (1x1 or 3x3/pad1; bias dropped — it cancels in train-mode BN) followed by
    BatchNorm2d with batch statistics (accumulated inside the matmul kernel), optional
    residual add, optional ReLU.  NHWC, bf16 activations."""
    kh, kw, cin, cout = w.shape
    n = x.shape[0]
    if kh == 1 and kw == 1:
        if stride > 1:
            x = x[:, ::stride, ::stride, :]
        _, ho, wo, _ = x.shape
        x2d = x.reshape(n * ho * wo, cin)
    else:
        # TODO(synk): fold the 9-tap im2col into the matmul grid (tap axis in the
        # index_map) to avoid materializing the patch matrix in HBM.
        x2d, ho, wo = _im2col_3x3(x, stride)

    y2d, s, ss = _conv_matmul_stats(x2d, w.reshape(kh * kw * cin, cout))

    cnt = float(n * ho * wo)
    mean = s / cnt
    var = jnp.maximum(ss / cnt - mean * mean, 0.0)       # biased batch variance
    gamma, beta = bn
    scale = gamma * lax.rsqrt(var + eps)
    shift = beta - mean * scale

    r2d = residual.reshape(n * ho * wo, cout) if residual is not None else None
    out2d = _affine_act(y2d, scale, shift, r2d, relu)
    return out2d.reshape(n, ho, wo, cout)


@jax.jit
def conv1x1_bias(x, w, b):
    """OutConv: 1x1 conv with bias, f32 output."""
    n, h, wd, cin = x.shape
    cout = w.shape[-1]
    y = _conv_matmul_bias(x.reshape(n * h * wd, cin), w.reshape(cin, cout), b)
    return y.reshape(n, h, wd, cout)


def max_pool_3x3_s2_p1(x):
    init = jnp.array(-jnp.inf, dtype=x.dtype)
    return lax.reduce_window(x, init, lax.max,
                             window_dimensions=(1, 3, 3, 1),
                             window_strides=(1, 2, 2, 1),
                             padding=((0, 0), (1, 1), (1, 1), (0, 0)))


def upsample_bilinear_2x(x):
    """nn.Upsample(scale_factor=2, mode='bilinear', align_corners=True), NHWC, bf16."""
    n, h, w, c = x.shape
    ho, wo = h * 2, w * 2

    def coords(size_in, size_out):
        if size_in == 1:
            z = jnp.zeros((size_out,), jnp.int32)
            return z, z, jnp.zeros((size_out,), jnp.float32)
        src = jnp.arange(size_out, dtype=jnp.float32) * (size_in - 1) / (size_out - 1)
        i0 = jnp.clip(jnp.floor(src).astype(jnp.int32), 0, size_in - 2)
        frac = src - i0.astype(jnp.float32)
        return i0, i0 + 1, frac

    y0, y1, fy = coords(h, ho)
    x0, x1, fx = coords(w, wo)
    rows = (x[:, y0, :, :] * (1.0 - fy)[None, :, None, None]
            + x[:, y1, :, :] * fy[None, :, None, None])
    out = (rows[:, :, x0, :] * (1.0 - fx)[None, None, :, None]
           + rows[:, :, x1, :] * fx[None, None, :, None])
    return out.astype(jnp.bfloat16)


def bottleneck_forward(x, p):
    stride = p["stride"]
    out = conv_bn_act(x, p["conv1"], p["bn1"])
    out = conv_bn_act(out, p["conv2"], p["bn2"], stride=stride)
    if "down_conv" in p:
        identity = conv_bn_act(x, p["down_conv"], p["down_bn"], stride=stride, relu=False)
    else:
        identity = x
    return conv_bn_act(out, p["conv3"], p["bn3"], residual=identity, relu=True)


def resnet_layer(x, layer_params):
    for p in layer_params:
        x = bottleneck_forward(x, p)
    return x


def double_conv(x, p):
    x = conv_bn_act(x, p["w1"], p["bn1"])
    return conv_bn_act(x, p["w2"], p["bn2"])


def up_block(x1, x2, p):
    x1 = upsample_bilinear_2x(x1)
    dy = x2.shape[1] - x1.shape[1]
    dx = x2.shape[2] - x1.shape[2]
    if dy or dx:
        x1 = jnp.pad(x1, ((0, 0), (dy // 2, dy - dy // 2),
                          (dx // 2, dx - dx // 2), (0, 0)))
    x = jnp.concatenate([x2, x1], axis=-1)   # torch.cat([x2, x1], dim=1) -> channel axis
    x = conv_bn_act(x, p["conv1"]["w"], p["conv1"]["bn"])
    return conv_bn_act(x, p["conv2"]["w"], p["conv2"]["bn"])


def resnet50_unet_loc_forward(x_nchw, params):
    x = jnp.transpose(x_nchw, (0, 2, 3, 1)).astype(jnp.bfloat16)  # NCHW -> NHWC
    x = double_conv(x, params["inc"])
    d1 = resnet_layer(max_pool_3x3_s2_p1(x), params["layer1"])
    d2 = resnet_layer(d1, params["layer2"])
    d3 = resnet_layer(d2, params["layer3"])
    d4 = resnet_layer(d3, params["layer4"])
    u1 = up_block(d4, d3, params["up1"])
    u2 = up_block(u1, d2, params["up2"])
    u3 = up_block(u2, d1, params["up3"])
    u4 = up_block(u3, x, params["up4"])
    out = conv1x1_bias(u4, params["outc"]["w"], params["outc"]["b"])   # OutConv 1x1
    return jnp.transpose(out, (0, 3, 1, 2))                            # NHWC -> NCHW


# ----------------------------------------------------------------------
# Deterministic parameter init (kaiming-normal convs -> bf16, BN gamma=1 beta=0)
# ----------------------------------------------------------------------

class KeyGen:
    def __init__(self, key):
        self._key = key
        self._i = 0

    def __call__(self):
        self._i += 1
        return jax.random.fold_in(self._key, self._i)


def conv_weight(kg, kh, kw, cin, cout):
    std = math.sqrt(2.0 / (cin * kh * kw))
    w = jax.random.normal(kg(), (kh, kw, cin, cout), jnp.float32) * std
    return w.astype(jnp.bfloat16)


def bn_params(c):
    return (jnp.ones((c,), jnp.float32), jnp.zeros((c,), jnp.float32))


def init_params(key, n_channels=3, n_classes=1):
    kg = KeyGen(key)
    p = {}
    p["inc"] = {
        "w1": conv_weight(kg, 3, 3, n_channels, 64), "bn1": bn_params(64),
        "w2": conv_weight(kg, 3, 3, 64, 64), "bn2": bn_params(64),
    }

    def bottleneck_p(inplanes, planes, stride):
        d = {
            "stride": stride,
            "conv1": conv_weight(kg, 1, 1, inplanes, planes), "bn1": bn_params(planes),
            "conv2": conv_weight(kg, 3, 3, planes, planes), "bn2": bn_params(planes),
            "conv3": conv_weight(kg, 1, 1, planes, planes * 4), "bn3": bn_params(planes * 4),
        }
        if stride != 1 or inplanes != planes * 4:
            d["down_conv"] = conv_weight(kg, 1, 1, inplanes, planes * 4)
            d["down_bn"] = bn_params(planes * 4)
        return d

    def layer_p(inplanes, planes, blocks, stride):
        ps = [bottleneck_p(inplanes, planes, stride)]
        for _ in range(blocks - 1):
            ps.append(bottleneck_p(planes * 4, planes, 1))
        return ps

    # torchvision resnet50: layer1..layer4 (stem conv not used by this model)
    p["layer1"] = layer_p(64, 64, 3, 1)
    p["layer2"] = layer_p(256, 128, 4, 2)
    p["layer3"] = layer_p(512, 256, 6, 2)
    p["layer4"] = layer_p(1024, 512, 3, 2)

    def cbr_p(cin, cout):
        return {"w": conv_weight(kg, 3, 3, cin, cout), "bn": bn_params(cout)}

    enc = [64, 256, 512, 1024, 2048]
    dec = [2048, 1024, 512, 256, 64]
    p["up1"] = {"conv1": cbr_p(enc[3] + dec[0], dec[1]), "conv2": cbr_p(dec[1], dec[1])}
    p["up2"] = {"conv1": cbr_p(enc[2] + dec[1], dec[2]), "conv2": cbr_p(dec[2], dec[2])}
    p["up3"] = {"conv1": cbr_p(enc[1] + dec[2], dec[3]), "conv2": cbr_p(dec[3], dec[3])}
    p["up4"] = {"conv1": cbr_p(enc[0] + dec[3], dec[4]), "conv2": cbr_p(dec[4], dec[4])}
    p["outc"] = {"w": conv_weight(kg, 1, 1, dec[4], n_classes),
                 "b": jnp.zeros((n_classes,), jnp.float32)}
    return p


# ----------------------------------------------------------------------

if __name__ == "__main__":
    key = jax.random.PRNGKey(0)
    params = init_params(jax.random.fold_in(key, 1))
    # small input: batch=2, n_channels=3 (fixed by the module), spatial=16x16
    x = jax.random.normal(jax.random.fold_in(key, 2), (2, 3, 16, 16), jnp.float32)

    out = resnet50_unet_loc_forward(x, params)
    out = jax.block_until_ready(out)
    assert out.shape == (2, 1, 16, 16), out.shape
    assert out.dtype == jnp.float32
    assert bool(jnp.all(jnp.isfinite(out)))
    print("KERNEL_OK")
</pallas_src>

<mosaic_0001>
module attributes {stable_mosaic.version = 11 : i64} {
  func.func @_matmul_stats_kernel(%arg0: i32, %arg1: i32, %arg2: i32, %arg3: memref<512x128xbf16, #tpu.memory_space<vmem>>, %arg4: memref<128x128xbf16, #tpu.memory_space<vmem>>, %arg5: memref<512x128xbf16, #tpu.memory_space<vmem>>, %arg6: memref<1x8x128xf32, #tpu.memory_space<vmem>>, %arg7: memref<1x8x128xf32, #tpu.memory_space<vmem>>, %arg8: memref<512x128xf32, #tpu.memory_space<vmem>>) attributes {dimension_semantics = [#tpu.dimension_semantics<parallel>, #tpu.dimension_semantics<parallel>, #tpu.dimension_semantics<arbitrary>], iteration_bounds = array<i64: 1, 1, 1>, scalar_prefetch = 0 : i64, scratch_operands = 1 : i64, tpu.core_type = #tpu.core_type<tc>, window_params = [{transform_indices = @transform_0, window_bounds = array<i64: 512, 128>}, {transform_indices = @transform_1, window_bounds = array<i64: 128, 128>}, {transform_indices = @transform_2, window_bounds = array<i64: 512, 128>}, {transform_indices = @transform_3, window_bounds = array<i64: 1, 8, 128>}, {transform_indices = @transform_4, window_bounds = array<i64: 1, 8, 128>}]} {
    %c0_i32 = arith.constant 0 : i32
    %0 = arith.cmpi eq, %arg2, %c0_i32 : i32
    %1 = arith.extui %0 : i1 to i32
    %c0_i32_0 = arith.constant 0 : i32
    %2 = arith.cmpi ne, %1, %c0_i32_0 : i32
    scf.if %2 {
      %cst_10 = arith.constant 0.000000e+00 : f32
      %12 = vector.broadcast %cst_10 : f32 to vector<512x128xf32>
      %c0_11 = arith.constant 0 : index
      %c0_12 = arith.constant 0 : index
      %13 = vector.load %arg8[%c0_11, %c0_12] : memref<512x128xf32, #tpu.memory_space<vmem>>, vector<512x128xf32>
      tpu.vector_store %arg8[%c0_11, %c0_12], %12 {strides = array<i32>} : memref<512x128xf32, #tpu.memory_space<vmem>>, vector<512x128xf32>,
    } else {
    }
    %c0 = arith.constant 0 : index
    %c0_1 = arith.constant 0 : index
    %3 = vector.load %arg8[%c0, %c0_1] : memref<512x128xf32, #tpu.memory_space<vmem>>, vector<512x128xf32>
    %c0_2 = arith.constant 0 : index
    %c0_3 = arith.constant 0 : index
    %4 = vector.load %arg3[%c0_2, %c0_3] : memref<512x128xbf16, #tpu.memory_space<vmem>>, vector<512x128xbf16>
    %c0_4 = arith.constant 0 : index
    %c0_5 = arith.constant 0 : index
    %5 = vector.load %arg4[%c0_4, %c0_5] : memref<128x128xbf16, #tpu.memory_space<vmem>>, vector<128x128xbf16>
    %cst = arith.constant dense<0.000000e+00> : vector<512x128xf32>
    %6 = tpu.matmul %4, %5, %cst {dimension_numbers = #tpu.dot_dimension_numbers<[1], [0], [0], [1], [0, 0, 1, 1], [], []>} : vector<512x128xbf16>, vector<128x128xbf16>, vector<512x128xf32> -> vector<512x128xf32>
    %7 = arith.addf %3, %6 : vector<512x128xf32>
    %c0_6 = arith.constant 0 : index
    %c0_7 = arith.constant 0 : index
    %8 = vector.load %arg8[%c0_6, %c0_7] : memref<512x128xf32, #tpu.memory_space<vmem>>, vector<512x128xf32>
    tpu.vector_store %arg8[%c0_6, %c0_7], %7 {strides = array<i32>} : memref<512x128xf32, #tpu.memory_space<vmem>>, vector<512x128xf32>,
    %c0_i32_8 = arith.constant 0 : i32
    %9 = arith.cmpi eq, %arg2, %c0_i32_8 : i32
    %10 = arith.extui %9 : i1 to i32
    %c0_i32_9 = arith.constant 0 : i32
    %11 = arith.cmpi ne, %10, %c0_i32_9 : i32
    scf.if %11 {
      %c0_10 = arith.constant 0 : index
      %c0_11 = arith.constant 0 : index
      %12 = vector.load %arg8[%c0_10, %c0_11] : memref<512x128xf32, #tpu.memory_space<vmem>>, vector<512x128xf32>
      %13 = arith.truncf %12 : vector<512x128xf32> to vector<512x128xbf16>
      %c0_12 = arith.constant 0 : index
      %c0_13 = arith.constant 0 : index
      %14 = vector.load %arg5[%c0_12, %c0_13] : memref<512x128xbf16, #tpu.memory_space<vmem>>, vector<512x128xbf16>
      tpu.vector_store %arg5[%c0_12, %c0_13], %13 {strides = array<i32>} : memref<512x128xbf16, #tpu.memory_space<vmem>>, vector<512x128xbf16>,
      %cst_14 = arith.constant dense<0.000000e+00> : vector<128xf32>
      %15 = vector.multi_reduction <add>, %12, %cst_14 [0] : vector<512x128xf32> to vector<128xf32>
      %16 = vector.shape_cast %15 : vector<128xf32> to vector<1x128xf32>
      %17 = arith.mulf %12, %12 : vector<512x128xf32>
      %cst_15 = arith.constant dense<0.000000e+00> : vector<128xf32>
      %18 = vector.multi_reduction <add>, %17, %cst_15 [0] : vector<512x128xf32> to vector<128xf32>
      %19 = vector.shape_cast %18 : vector<128xf32> to vector<1x128xf32>
      %20 = vector.shape_cast %16 : vector<1x128xf32> to vector<1x128xf32>
      %21 = vector.broadcast %20 : vector<1x128xf32> to vector<8x128xf32>
      %c0_16 = arith.constant 0 : index
      %c0_17 = arith.constant 0 : index
      %c0_18 = arith.constant 0 : index
      %22 = vector.load %arg6[%c0_16, %c0_17, %c0_18] : memref<1x8x128xf32, #tpu.memory_space<vmem>>, vector<1x8x128xf32>
      %23 = vector.shape_cast %22 : vector<1x8x128xf32> to vector<8x128xf32>
      %24 = vector.shape_cast %21 : vector<8x128xf32> to vector<1x8x128xf32>
      tpu.vector_store %arg6[%c0_16, %c0_17, %c0_18], %24 {strides = array<i32>} : memref<1x8x128xf32, #tpu.memory_space<vmem>>, vector<1x8x128xf32>,
      %25 = vector.shape_cast %19 : vector<1x128xf32> to vector<1x128xf32>
      %26 = vector.broadcast %25 : vector<1x128xf32> to vector<8x128xf32>
      %c0_19 = arith.constant 0 : index
      %c0_20 = arith.constant 0 : index
      %c0_21 = arith.constant 0 : index
      %27 = vector.load %arg7[%c0_19, %c0_20, %c0_21] : memref<1x8x128xf32, #tpu.memory_space<vmem>>, vector<1x8x128xf32>
      %28 = vector.shape_cast %27 : vector<1x8x128xf32> to vector<8x128xf32>
      %29 = vector.shape_cast %26 : vector<8x128xf32> to vector<1x8x128xf32>
      tpu.vector_store %arg7[%c0_19, %c0_20, %c0_21], %29 {strides = array<i32>} : memref<1x8x128xf32, #tpu.memory_space<vmem>>, vector<1x8x128xf32>,
    } else {
    }
    return
  }
  func.func @transform_0(%arg0: i32, %arg1: i32, %arg2: i32) -> (i32, i32) {
    %c0_i32 = arith.constant 0 : i32
    return %arg0, %arg2 : i32, i32
  }
  func.func @transform_1(%arg0: i32, %arg1: i32, %arg2: i32) -> (i32, i32) {
    %c0_i32 = arith.constant 0 : i32
    return %arg2, %arg1 : i32, i32
  }
  func.func @transform_2(%arg0: i32, %arg1: i32, %arg2: i32) -> (i32, i32) {
    %c0_i32 = arith.constant 0 : i32
    return %arg0, %arg1 : i32, i32
  }
  func.func @transform_3(%arg0: i32, %arg1: i32, %arg2: i32) -> (i32, i32, i32) {
    %c0_i32 = arith.constant 0 : i32
    %c0_i32_0 = arith.constant 0 : i32
    return %arg0, %c0_i32, %arg1 : i32, i32, i32
  }
  func.func @transform_4(%arg0: i32, %arg1: i32, %arg2: i32) -> (i32, i32, i32) {
    %c0_i32 = arith.constant 0 : i32
    %c0_i32_0 = arith.constant 0 : i32
    return %arg0, %c0_i32, %arg1 : i32, i32, i32
  }
}

module attributes {stable_mosaic.version = 11 : i64} {
  func.func @kernel(%arg0: i32, %arg1: i32, %arg2: memref<512x128xbf16, #tpu.memory_space<vmem>>, %arg3: memref<1x128xf32, #tpu.memory_space<vmem>>, %arg4: memref<1x128xf32, #tpu.memory_space<vmem>>, %arg5: memref<512x128xbf16, #tpu.memory_space<vmem>>) attributes {dimension_semantics = [#tpu.dimension_semantics<parallel>, #tpu.dimension_semantics<parallel>], iteration_bounds = array<i64: 1, 1>, scalar_prefetch = 0 : i64, scratch_operands = 0 : i64, tpu.core_type = #tpu.core_type<tc>, window_params = [{transform_indices = @transform_0, window_bounds = array<i64: 512, 128>}, {transform_indices = @transform_1, window_bounds = array<i64: 1, 128>}, {transform_indices = @transform_2, window_bounds = array<i64: 1, 128>}, {transform_indices = @transform_3, window_bounds = array<i64: 512, 128>}]} {
    %c0 = arith.constant 0 : index
    %c0_0 = arith.constant 0 : index
    %0 = vector.load %arg2[%c0, %c0_0] : memref<512x128xbf16, #tpu.memory_space<vmem>>, vector<512x128xbf16>
    %1 = arith.extf %0 : vector<512x128xbf16> to vector<512x128xf32>
    %c0_1 = arith.constant 0 : index
    %c0_2 = arith.constant 0 : index
    %2 = vector.load %arg3[%c0_1, %c0_2] : memref<1x128xf32, #tpu.memory_space<vmem>>, vector<1x128xf32>
    %3 = vector.broadcast %2 : vector<1x128xf32> to vector<512x128xf32>
    %4 = arith.mulf %1, %3 : vector<512x128xf32>
    %c0_3 = arith.constant 0 : index
    %c0_4 = arith.constant 0 : index
    %5 = vector.load %arg4[%c0_3, %c0_4] : memref<1x128xf32, #tpu.memory_space<vmem>>, vector<1x128xf32>
    %6 = vector.broadcast %5 : vector<1x128xf32> to vector<512x128xf32>
    %7 = arith.addf %4, %6 : vector<512x128xf32>
    %cst = arith.constant 0.000000e+00 : f32
    %8 = vector.broadcast %cst : f32 to vector<512x128xf32>
    %9 = arith.maximumf %7, %8 : vector<512x128xf32>
    %10 = arith.truncf %9 : vector<512x128xf32> to vector<512x128xbf16>
    %c0_5 = arith.constant 0 : index
    %c0_6 = arith.constant 0 : index
    %11 = vector.load %arg5[%c0_5, %c0_6] : memref<512x128xbf16, #tpu.memory_space<vmem>>, vector<512x128xbf16>
    tpu.vector_store %arg5[%c0_5, %c0_6], %10 {strides = array<i32>} : memref<512x128xbf16, #tpu.memory_space<vmem>>, vector<512x128xbf16>,
    return
  }
  func.func @transform_0(%arg0: i32, %arg1: i32) -> (i32, i32) {
    %c0_i32 = arith.constant 0 : i32
    return %arg0, %arg1 : i32, i32
  }
  func.func @transform_1(%arg0: i32, %arg1: i32) -> (i32, i32) {
    %c0_i32 = arith.constant 0 : i32
    %c0_i32_0 = arith.constant 0 : i32
    return %c0_i32, %arg1 : i32, i32
  }
  func.func @transform_2(%arg0: i32, %arg1: i32) -> (i32, i32) {
    %c0_i32 = arith.constant 0 : i32
    %c0_i32_0 = arith.constant 0 : i32
    return %c0_i32, %arg1 : i32, i32
  }
  func.func @transform_3(%arg0: i32, %arg1: i32) -> (i32, i32) {
    %c0_i32 = arith.constant 0 : i32
    return %arg0, %arg1 : i32, i32
  }
}

</mosaic_0001>

<llo_original>
// kernel: conv_bn_act.3
$region0: #{conv_bn_act.3}
  #allocation0 [shape = 'u32[]', space=smem, size = 0x4, offset = 0x4, fixed_abs, tag = 'smem constant byte address 0x4 - core index']
  #allocation1 [shape = 'u32[144,128]{1,0:T(1,128)}', space=vmem, size = 0x12000, scoped, tag = 'internal scratch']
  %s0 = inlined_call_operand.vmem [shape: bf16[512,128], index: 0, kind: input, shape index: {}]
  %s1 = inlined_call_operand.vmem [shape: f32[1,128], index: 1, kind: input, shape index: {}]
  %s2 = inlined_call_operand.vmem [shape: f32[1,128], index: 2, kind: input, shape index: {}]
  %s3 = inlined_call_operand.hbm [shape: bf16[512,128], index: 3, kind: output, shape index: {}]
  %s4 = sld [smem:[#allocation0]]
  $region22: #{conv_bn_act.3} parent=0
    _
  %s6 = ssub.s32 1, %s4
  %s7 = scalar_select 0, %s6, %s4
  $region1: #{conv_bn_act.3} parent=0
    #allocation2 [shape = 'u8[131072]{0}', space=vmem, size = 0x20000, scoped, tag = 'output window, operand 0, single buffered']
    #allocation3 [shape = 's32[1]{0}', space=sflag, size = 0x4, scoped, tag = 'scoped memory for conv_bn_act.3']
    %8 = vsyncpa [#allocation3], 0
    // Predicated region
    $region2: #{conv_bn_act.3} parent=1 // pred_check
      _
    $region3: #{conv_bn_act.3} parent=1 // pred_check_branch
      %10 = sbr.rel (0) target = $region5
    $region4: #{conv_bn_act.3} parent=1 // pred_region
      _
    $region5: #{conv_bn_act.3} parent=1 // pred_fallthru
      _
    // Predicated region
    $region6: #{conv_bn_act.3} parent=1 // pred_check
      _
    $region7: #{conv_bn_act.3} parent=1 // pred_check_branch
      %12 = sbr.rel (0) target = $region9
    $region8: #{conv_bn_act.3} parent=1 // pred_region
      _
    $region9: #{conv_bn_act.3} parent=1 // pred_fallthru
      _
    // Predicated region
    $region10: #{conv_bn_act.3} parent=1 // pred_check
      _
    $region11: #{conv_bn_act.3} parent=1 // pred_check_branch
      %14 = sbr.rel (0) target = $region13
    $region12: #{conv_bn_act.3} parent=1 // pred_region
      _
    $region13: #{conv_bn_act.3} parent=1 // pred_fallthru
      _
    %v15 = vld [vmem:[%s0] sm:$0xf]
    %v16 = vld [vmem:[%s0 + $0x4] sm:$0xf]
    %v17 = vld [vmem:[%s0 + $0x8] sm:$0xf]
    %v18 = vld [vmem:[%s0 + $0xc] sm:$0xf]
    %v19 = vld [vmem:[%s0 + $0x10] sm:$0xf]
    %v20 = vld [vmem:[%s0 + $0x14] sm:$0xf]
    %v21 = vld [vmem:[%s0 + $0x18] sm:$0xf]
    %v22 = vld [vmem:[%s0 + $0x1c] sm:$0xf]
    %v23 = vld [vmem:[%s0 + $0x20] sm:$0xf]
    %v24 = vld [vmem:[%s0 + $0x24] sm:$0xf]
    %v25 = vld [vmem:[%s0 + $0x28] sm:$0xf]
    %v26 = vld [vmem:[%s0 + $0x2c] sm:$0xf]
    %v27 = vld [vmem:[%s0 + $0x30] sm:$0xf]
    %v28 = vld [vmem:[%s0 + $0x34] sm:$0xf]
    %v29 = vld [vmem:[%s0 + $0x38] sm:$0xf]
    %v30 = vld [vmem:[%s0 + $0x3c] sm:$0xf]
    %v31 = vld [vmem:[%s0 + $0x40] sm:$0xf]
    %v32 = vld [vmem:[%s0 + $0x44] sm:$0xf]
    %v33 = vld [vmem:[%s0 + $0x48] sm:$0xf]
    %v34 = vld [vmem:[%s0 + $0x4c] sm:$0xf]
    %v35 = vld [vmem:[%s0 + $0x50] sm:$0xf]
    %v36 = vld [vmem:[%s0 + $0x54] sm:$0xf]
    %v37 = vld [vmem:[%s0 + $0x58] sm:$0xf]
    %v38 = vld [vmem:[%s0 + $0x5c] sm:$0xf]
    %v39 = vld [vmem:[%s0 + $0x60] sm:$0xf]
    %v40 = vld [vmem:[%s0 + $0x64] sm:$0xf]
    %v41 = vld [vmem:[%s0 + $0x68] sm:$0xf]
    %v42 = vld [vmem:[%s0 + $0x6c] sm:$0xf]
    %v43 = vld [vmem:[%s0 + $0x70] sm:$0xf]
    %v44 = vld [vmem:[%s0 + $0x74] sm:$0xf]
    %v45 = vld [vmem:[%s0 + $0x78] sm:$0xf]
    %v46 = vld [vmem:[%s0 + $0x7c] sm:$0xf]
    %v47 = vld [vmem:[%s0 + $0x80] sm:$0xf]
    %v48 = vld [vmem:[%s0 + $0x84] sm:$0xf]
    %v49 = vld [vmem:[%s0 + $0x88] sm:$0xf]
    %v50 = vld [vmem:[%s0 + $0x8c] sm:$0xf]
    %v51 = vld [vmem:[%s0 + $0x90] sm:$0xf]
    %v52 = vld [vmem:[%s0 + $0x94] sm:$0xf]
    %v53 = vld [vmem:[%s0 + $0x98] sm:$0xf]
    %v54 = vld [vmem:[%s0 + $0x9c] sm:$0xf]
    %v55 = vld [vmem:[%s0 + $0xa0] sm:$0xf]
    %v56 = vld [vmem:[%s0 + $0xa4] sm:$0xf]
    %v57 = vld [vmem:[%s0 + $0xa8] sm:$0xf]
    %v58 = vld [vmem:[%s0 + $0xac] sm:$0xf]
    %v59 = vld [vmem:[%s0 + $0xb0] sm:$0xf]
    %v60 = vld [vmem:[%s0 + $0xb4] sm:$0xf]
    %v61 = vld [vmem:[%s0 + $0xb8] sm:$0xf]
    %v62 = vld [vmem:[%s0 + $0xbc] sm:$0xf]
    %v63 = vld [vmem:[%s0 + $0xc0] sm:$0xf]
    %v64 = vld [vmem:[%s0 + $0xc4] sm:$0xf]
    %v65 = vld [vmem:[%s0 + $0xc8] sm:$0xf]
    %v66 = vld [vmem:[%s0 + $0xcc] sm:$0xf]
    %v67 = vld [vmem:[%s0 + $0xd0] sm:$0xf]
    %v68 = vld [vmem:[%s0 + $0xd4] sm:$0xf]
    %v69 = vld [vmem:[%s0 + $0xd8] sm:$0xf]
    %v70 = vld [vmem:[%s0 + $0xdc] sm:$0xf]
    %v71 = vld [vmem:[%s0 + $0xe0] sm:$0xf]
    %v72 = vld [vmem:[%s0 + $0xe4] sm:$0xf]
    %v73 = vld [vmem:[%s0 + $0xe8] sm:$0xf]
    %v74 = vld [vmem:[%s0 + $0xec] sm:$0xf]
    %v75 = vld [vmem:[%s0 + $0xf0] sm:$0xf]
    %v76 = vld [vmem:[%s0 + $0xf4] sm:$0xf]
    %v77 = vld [vmem:[%s0 + $0xf8] sm:$0xf]
    %v78 = vld [vmem:[%s0 + $0xfc] sm:$0xf]
    %v79 = vunpack.c.l.bf16 %v15
    %v80 = vunpack.c.l.bf16 %v16
    %v81 = vunpack.c.l.bf16 %v17
    %v82 = vunpack.c.l.bf16 %v18
    %v83 = vunpack.c.l.bf16 %v19
    %v84 = vunpack.c.l.bf16 %v20
    %v85 = vunpack.c.l.bf16 %v21
    %v86 = vunpack.c.l.bf16 %v22
    %v87 = vunpack.c.l.bf16 %v23
    %v88 = vunpack.c.l.bf16 %v24
    %v89 = vunpack.c.l.bf16 %v25
    %v90 = vunpack.c.l.bf16 %v26
    %v91 = vunpack.c.l.bf16 %v27
    %v92 = vunpack.c.l.bf16 %v28
    %v93 = vunpack.c.l.bf16 %v29
    %v94 = vunpack.c.l.bf16 %v30
    %v95 = vunpack.c.l.bf16 %v31
    %v96 = vunpack.c.l.bf16 %v32
    %v97 = vunpack.c.l.bf16 %v33
    %v98 = vunpack.c.l.bf16 %v34
    %v99 = vunpack.c.l.bf16 %v35
    %v100 = vunpack.c.l.bf16 %v36
    %v101 = vunpack.c.l.bf16 %v37
    %v102 = vunpack.c.l.bf16 %v38
    %v103 = vunpack.c.l.bf16 %v39
    %v104 = vunpack.c.l.bf16 %v40
    %v105 = vunpack.c.l.bf16 %v41
    %v106 = vunpack.c.l.bf16 %v42
    %v107 = vunpack.c.l.bf16 %v43
    %v108 = vunpack.c.l.bf16 %v44
    %v109 = vunpack.c.l.bf16 %v45
    %v110 = vunpack.c.l.bf16 %v46
    %v111 = vunpack.c.l.bf16 %v47
    %v112 = vunpack.c.l.bf16 %v48
    %v113 = vunpack.c.l.bf16 %v49
    %v114 = vunpack.c.l.bf16 %v50
    %v115 = vunpack.c.l.bf16 %v51
    %v116 = vunpack.c.l.bf16 %v52
    %v117 = vunpack.c.l.bf16 %v53
    %v118 = vunpack.c.l.bf16 %v54
    %v119 = vunpack.c.l.bf16 %v55
    %v120 = vunpack.c.l.bf16 %v56
    %v121 = vunpack.c.l.bf16 %v57
    %v122 = vunpack.c.l.bf16 %v58
    %v123 = vunpack.c.l.bf16 %v59
    %v124 = vunpack.c.l.bf16 %v60
    %v125 = vunpack.c.l.bf16 %v61
    %v126 = vunpack.c.l.bf16 %v62
    %v127 = vunpack.c.l.bf16 %v63
    %v128 = vunpack.c.l.bf16 %v64
    %v129 = vunpack.c.l.bf16 %v65
    %v130 = vunpack.c.l.bf16 %v66
    %v131 = vunpack.c.l.bf16 %v67
    %v132 = vunpack.c.l.bf16 %v68
    %v133 = vunpack.c.l.bf16 %v69
    %v134 = vunpack.c.l.bf16 %v70
    %v135 = vunpack.c.l.bf16 %v71
    %v136 = vunpack.c.l.bf16 %v72
    %v137 = vunpack.c.l.bf16 %v73
    %v138 = vunpack.c.l.bf16 %v74
    %v139 = vunpack.c.l.bf16 %v75
    %v140 = vunpack.c.l.bf16 %v76
    %v141 = vunpack.c.l.bf16 %v77
    %v142 = vunpack.c.l.bf16 %v78
    %v143 = vld [vmem:[%s1] sm:$0x1]
    %v145 = vlaneseq
    %v146 = vshrl.u32 %v145, 7
    %v147 = vsub.s32 0, %v146
    %v148 = vrot.slane %v143, %v147
    %v150 = vmul.f32 %v79, %v148
    %v151 = vmul.f32 %v80, %v148
    %v152 = vmul.f32 %v81, %v148
    %v153 = vmul.f32 %v82, %v148
    %v154 = vmul.f32 %v83, %v148
    %v155 = vmul.f32 %v84, %v148
    %v156 = vmul.f32 %v85, %v148
    %v157 = vmul.f32 %v86, %v148
    %v158 = vmul.f32 %v87, %v148
    %v159 = vmul.f32 %v88, %v148
    %v160 = vmul.f32 %v89, %v148
    %v161 = vmul.f32 %v90, %v148
    %v162 = vmul.f32 %v91, %v148
    %v163 = vmul.f32 %v92, %v148
    %v164 = vmul.f32 %v93, %v148
    %v165 = vmul.f32 %v94, %v148
    %v166 = vmul.f32 %v95, %v148
    %v167 = vmul.f32 %v96, %v148
    %v168 = vmul.f32 %v97, %v148
    %v169 = vmul.f32 %v98, %v148
    %v170 = vmul.f32 %v99, %v148
    %v171 = vmul.f32 %v100, %v148
    %v172 = vmul.f32 %v101, %v148
    %v173 = vmul.f32 %v102, %v148
    %v174 = vmul.f32 %v103, %v148
    %v175 = vmul.f32 %v104, %v148
    %v176 = vmul.f32 %v105, %v148
    %v177 = vmul.f32 %v106, %v148
    %v178 = vmul.f32 %v107, %v148
    %v179 = vmul.f32 %v108, %v148
    %v180 = vmul.f32 %v109, %v148
    %v181 = vmul.f32 %v110, %v148
    %v182 = vmul.f32 %v111, %v148
    %v183 = vmul.f32 %v112, %v148
    %v184 = vmul.f32 %v113, %v148
    %v185 = vmul.f32 %v114, %v148
    %v186 = vmul.f32 %v115, %v148
    %v187 = vmul.f32 %v116, %v148
    %v188 = vmul.f32 %v117, %v148
    %v189 = vmul.f32 %v118, %v148
    %v190 = vmul.f32 %v119, %v148
    %v191 = vmul.f32 %v120, %v148
    %v192 = vmul.f32 %v121, %v148
    %v193 = vmul.f32 %v122, %v148
    %v194 = vmul.f32 %v123, %v148
    %v195 = vmul.f32 %v124, %v148
    %v196 = vmul.f32 %v125, %v148
    %v197 = vmul.f32 %v126, %v148
    %v198 = vmul.f32 %v127, %v148
    %v199 = vmul.f32 %v128, %v148
    %v200 = vmul.f32 %v129, %v148
    %v201 = vmul.f32 %v130, %v148
    %v202 = vmul.f32 %v131, %v148
    %v203 = vmul.f32 %v132, %v148
    %v204 = vmul.f32 %v133, %v148
    %v205 = vmul.f32 %v134, %v148
    %v206 = vmul.f32 %v135, %v148
    %v207 = vmul.f32 %v136, %v148
    %v208 = vmul.f32 %v137, %v148
    %v209 = vmul.f32 %v138, %v148
    %v210 = vmul.f32 %v139, %v148
    %v211 = vmul.f32 %v140, %v148
    %v212 = vmul.f32 %v141, %v148
    %v213 = vmul.f32 %v142, %v148
    %v214 = vld [vmem:[%s2] sm:$0x1]
    %v216 = vlaneseq
    %v217 = vshrl.u32 %v216, 7
    %v218 = vsub.s32 0, %v217
    %v219 = vrot.slane %v214, %v218
    %v221 = vadd.f32 %v150, %v219
    %v222 = vadd.f32 %v151, %v219
    %v223 = vadd.f32 %v152, %v219
    %v224 = vadd.f32 %v153, %v219
    %v225 = vadd.f32 %v154, %v219
    %v226 = vadd.f32 %v155, %v219
    %v227 = vadd.f32 %v156, %v219
    %v228 = vadd.f32 %v157, %v219
    %v229 = vadd.f32 %v158, %v219
    %v230 = vadd.f32 %v159, %v219
    %v231 = vadd.f32 %v160, %v219
    %v232 = vadd.f32 %v161, %v219
    %v233 = vadd.f32 %v162, %v219
    %v234 = vadd.f32 %v163, %v219
    %v235 = vadd.f32 %v164, %v219
    %v236 = vadd.f32 %v165, %v219
    %v237 = vadd.f32 %v166, %v219
    %v238 = vadd.f32 %v167, %v219
    %v239 = vadd.f32 %v168, %v219
    %v240 = vadd.f32 %v169, %v219
    %v241 = vadd.f32 %v170, %v219
    %v242 = vadd.f32 %v171, %v219
    %v243 = vadd.f32 %v172, %v219
    %v244 = vadd.f32 %v173, %v219
    %v245 = vadd.f32 %v174, %v219
    %v246 = vadd.f32 %v175, %v219
    %v247 = vadd.f32 %v176, %v219
    %v248 = vadd.f32 %v177, %v219
    %v249 = vadd.f32 %v178, %v219
    %v250 = vadd.f32 %v179, %v219
    %v251 = vadd.f32 %v180, %v219
    %v252 = vadd.f32 %v181, %v219
    %v253 = vadd.f32 %v182, %v219
    %v254 = vadd.f32 %v183, %v219
    %v255 = vadd.f32 %v184, %v219
    %v256 = vadd.f32 %v185, %v219
    %v257 = vadd.f32 %v186, %v219
    %v258 = vadd.f32 %v187, %v219
    %v259 = vadd.f32 %v188, %v219
    %v260 = vadd.f32 %v189, %v219
    %v261 = vadd.f32 %v190, %v219
    %v262 = vadd.f32 %v191, %v219
    %v263 = vadd.f32 %v192, %v219
    %v264 = vadd.f32 %v193, %v219
    %v265 = vadd.f32 %v194, %v219
    %v266 = vadd.f32 %v195, %v219
    %v267 = vadd.f32 %v196, %v219
    %v268 = vadd.f32 %v197, %v219
    %v269 = vadd.f32 %v198, %v219
    %v270 = vadd.f32 %v199, %v219
    %v271 = vadd.f32 %v200, %v219
    %v272 = vadd.f32 %v201, %v219
    %v273 = vadd.f32 %v202, %v219
    %v274 = vadd.f32 %v203, %v219
    %v275 = vadd.f32 %v204, %v219
    %v276 = vadd.f32 %v205, %v219
    %v277 = vadd.f32 %v206, %v219
    %v278 = vadd.f32 %v207, %v219
    %v279 = vadd.f32 %v208, %v219
    %v280 = vadd.f32 %v209, %v219
    %v281 = vadd.f32 %v210, %v219
    %v282 = vadd.f32 %v211, %v219
    %v283 = vadd.f32 %v212, %v219
    %v284 = vadd.f32 %v213, %v219
    %v285 = vmax.f32 %v221, 0.0
    %v286 = vmax.f32 %v222, 0.0
    %v287 = vmax.f32 %v223, 0.0
    %v288 = vmax.f32 %v224, 0.0
    %v289 = vmax.f32 %v225, 0.0
    %v290 = vmax.f32 %v226, 0.0
    %v291 = vmax.f32 %v227, 0.0
    %v292 = vmax.f32 %v228, 0.0
    %v293 = vmax.f32 %v229, 0.0
    %v294 = vmax.f32 %v230, 0.0
    %v295 = vmax.f32 %v231, 0.0
    %v296 = vmax.f32 %v232, 0.0
    %v297 = vmax.f32 %v233, 0.0
    %v298 = vmax.f32 %v234, 0.0
    %v299 = vmax.f32 %v235, 0.0
    %v300 = vmax.f32 %v236, 0.0
    %v301 = vmax.f32 %v237, 0.0
    %v302 = vmax.f32 %v238, 0.0
    %v303 = vmax.f32 %v239, 0.0
    %v304 = vmax.f32 %v240, 0.0
    %v305 = vmax.f32 %v241, 0.0
    %v306 = vmax.f32 %v242, 0.0
    %v307 = vmax.f32 %v243, 0.0
    %v308 = vmax.f32 %v244, 0.0
    %v309 = vmax.f32 %v245, 0.0
    %v310 = vmax.f32 %v246, 0.0
    %v311 = vmax.f32 %v247, 0.0
    %v312 = vmax.f32 %v248, 0.0
    %v313 = vmax.f32 %v249, 0.0
    %v314 = vmax.f32 %v250, 0.0
    %v315 = vmax.f32 %v251, 0.0
    %v316 = vmax.f32 %v252, 0.0
    %v317 = vmax.f32 %v253, 0.0
    %v318 = vmax.f32 %v254, 0.0
    %v319 = vmax.f32 %v255, 0.0
    %v320 = vmax.f32 %v256, 0.0
    %v321 = vmax.f32 %v257, 0.0
    %v322 = vmax.f32 %v258, 0.0
    %v323 = vmax.f32 %v259, 0.0
    %v324 = vmax.f32 %v260, 0.0
    %v325 = vmax.f32 %v261, 0.0
    %v326 = vmax.f32 %v262, 0.0
    %v327 = vmax.f32 %v263, 0.0
    %v328 = vmax.f32 %v264, 0.0
    %v329 = vmax.f32 %v265, 0.0
    %v330 = vmax.f32 %v266, 0.0
    %v331 = vmax.f32 %v267, 0.0
    %v332 = vmax.f32 %v268, 0.0
    %v333 = vmax.f32 %v269, 0.0
    %v334 = vmax.f32 %v270, 0.0
    %v335 = vmax.f32 %v271, 0.0
    %v336 = vmax.f32 %v272, 0.0
    %v337 = vmax.f32 %v273, 0.0
    %v338 = vmax.f32 %v274, 0.0
    %v339 = vmax.f32 %v275, 0.0
    %v340 = vmax.f32 %v276, 0.0
    %v341 = vmax.f32 %v277, 0.0
    %v342 = vmax.f32 %v278, 0.0
    %v343 = vmax.f32 %v279, 0.0
    %v344 = vmax.f32 %v280, 0.0
    %v345 = vmax.f32 %v281, 0.0
    %v346 = vmax.f32 %v282, 0.0
    %v347 = vmax.f32 %v283, 0.0
    %v348 = vmax.f32 %v284, 0.0
    %v349 = vpack.c.bf16 %v286, %v285
    %v350 = vpack.c.bf16 %v288, %v287
    %v351 = vpack.c.bf16 %v290, %v289
    %v352 = vpack.c.bf16 %v292, %v291
    %v353 = vpack.c.bf16 %v294, %v293
    %v354 = vpack.c.bf16 %v296, %v295
    %v355 = vpack.c.bf16 %v298, %v297
    %v356 = vpack.c.bf16 %v300, %v299
    %v357 = vpack.c.bf16 %v302, %v301
    %v358 = vpack.c.bf16 %v304, %v303
    %v359 = vpack.c.bf16 %v306, %v305
    %v360 = vpack.c.bf16 %v308, %v307
    %v361 = vpack.c.bf16 %v310, %v309
    %v362 = vpack.c.bf16 %v312, %v311
    %v363 = vpack.c.bf16 %v314, %v313
    %v364 = vpack.c.bf16 %v316, %v315
    %v365 = vpack.c.bf16 %v318, %v317
    %v366 = vpack.c.bf16 %v320, %v319
    %v367 = vpack.c.bf16 %v322, %v321
    %v368 = vpack.c.bf16 %v324, %v323
    %v369 = vpack.c.bf16 %v326, %v325
    %v370 = vpack.c.bf16 %v328, %v327
    %v371 = vpack.c.bf16 %v330, %v329
    %v372 = vpack.c.bf16 %v332, %v331
    %v373 = vpack.c.bf16 %v334, %v333
    %v374 = vpack.c.bf16 %v336, %v335
    %v375 = vpack.c.bf16 %v338, %v337
    %v376 = vpack.c.bf16 %v340, %v339
    %v377 = vpack.c.bf16 %v342, %v341
    %v378 = vpack.c.bf16 %v344, %v343
    %v379 = vpack.c.bf16 %v346, %v345
    %v380 = vpack.c.bf16 %v348, %v347
    %v413 = vunpack.c.l.b16 %v349
    %v414 = vunpack.c.h.b16 %v349
    %v415 = vunpack.c.l.b16 %v350
    %v416 = vunpack.c.h.b16 %v350
    %v417 = vunpack.c.l.b16 %v351
    %v418 = vunpack.c.h.b16 %v351
    %v419 = vunpack.c.l.b16 %v352
    %v420 = vunpack.c.h.b16 %v352
    %v421 = vunpack.c.l.b16 %v353
    %v422 = vunpack.c.h.b16 %v353
    %v423 = vunpack.c.l.b16 %v354
    %v424 = vunpack.c.h.b16 %v354
    %v425 = vunpack.c.l.b16 %v355
    %v426 = vunpack.c.h.b16 %v355
    %v427 = vunpack.c.l.b16 %v356
    %v428 = vunpack.c.h.b16 %v356
    %v429 = vunpack.c.l.b16 %v357
    %v430 = vunpack.c.h.b16 %v357
    %v431 = vunpack.c.l.b16 %v358
    %v432 = vunpack.c.h.b16 %v358
    %v433 = vunpack.c.l.b16 %v359
    %v434 = vunpack.c.h.b16 %v359
    %v435 = vunpack.c.l.b16 %v360
    %v436 = vunpack.c.h.b16 %v360
    %v437 = vunpack.c.l.b16 %v361
    %v438 = vunpack.c.h.b16 %v361
    %v439 = vunpack.c.l.b16 %v362
    %v440 = vunpack.c.h.b16 %v362
    %v441 = vunpack.c.l.b16 %v363
    %v442 = vunpack.c.h.b16 %v363
    %v443 = vunpack.c.l.b16 %v364
    %v444 = vunpack.c.h.b16 %v364
    %v445 = vunpack.c.l.b16 %v365
    %v446 = vunpack.c.h.b16 %v365
    %v447 = vunpack.c.l.b16 %v366
    %v448 = vunpack.c.h.b16 %v366
    %v449 = vunpack.c.l.b16 %v367
    %v450 = vunpack.c.h.b16 %v367
    %v451 = vunpack.c.l.b16 %v368
    %v452 = vunpack.c.h.b16 %v368
    %v453 = vunpack.c.l.b16 %v369
    %v454 = vunpack.c.h.b16 %v369
    %v455 = vunpack.c.l.b16 %v370
    %v456 = vunpack.c.h.b16 %v370
    %v457 = vunpack.c.l.b16 %v371
    %v458 = vunpack.c.h.b16 %v371
    %v459 = vunpack.c.l.b16 %v372
    %v460 = vunpack.c.h.b16 %v372
    %v461 = vunpack.c.l.b16 %v373
    %v462 = vunpack.c.h.b16 %v373
    %v463 = vunpack.c.l.b16 %v374
    %v464 = vunpack.c.h.b16 %v374
    %v465 = vunpack.c.l.b16 %v375
    %v466 = vunpack.c.h.b16 %v375
    %v467 = vunpack.c.l.b16 %v376
    %v468 = vunpack.c.h.b16 %v376
    %v469 = vunpack.c.l.b16 %v377
    %v470 = vunpack.c.h.b16 %v377
    %v471 = vunpack.c.l.b16 %v378
    %v472 = vunpack.c.h.b16 %v378
    %v473 = vunpack.c.l.b16 %v379
    %v474 = vunpack.c.h.b16 %v379
    %v475 = vunpack.c.l.b16 %v380
    %v476 = vunpack.c.h.b16 %v380
    %v477 = vpack.c.b16 %v413, %v413
    %v478 = vpack.c.b16 %v414, %v414
    %v479 = vpack.c.b16 %v415, %v415
    %v480 = vpack.c.b16 %v416, %v416
    %v481 = vpack.c.b16 %v417, %v417
    %v482 = vpack.c.b16 %v418, %v418
    %v483 = vpack.c.b16 %v419, %v419
    %v484 = vpack.c.b16 %v420, %v420
    %v485 = vpack.c.b16 %v421, %v421
    %v486 = vpack.c.b16 %v422, %v422
    %v487 = vpack.c.b16 %v423, %v423
    %v488 = vpack.c.b16 %v424, %v424
    %v489 = vpack.c.b16 %v425, %v425
    %v490 = vpack.c.b16 %v426, %v426
    %v491 = vpack.c.b16 %v427, %v427
    %v492 = vpack.c.b16 %v428, %v428
    %v493 = vpack.c.b16 %v429, %v429
    %v494 = vpack.c.b16 %v430, %v430
    %v495 = vpack.c.b16 %v431, %v431
    %v496 = vpack.c.b16 %v432, %v432
    %v497 = vpack.c.b16 %v433, %v433
    %v498 = vpack.c.b16 %v434, %v434
    %v499 = vpack.c.b16 %v435, %v435
    %v500 = vpack.c.b16 %v436, %v436
    %v501 = vpack.c.b16 %v437, %v437
    %v502 = vpack.c.b16 %v438, %v438
    %v503 = vpack.c.b16 %v439, %v439
    %v504 = vpack.c.b16 %v440, %v440
    %v505 = vpack.c.b16 %v441, %v441
    %v506 = vpack.c.b16 %v442, %v442
    %v507 = vpack.c.b16 %v443, %v443
    %v508 = vpack.c.b16 %v444, %v444
    %v509 = vpack.c.b16 %v445, %v445
    %v510 = vpack.c.b16 %v446, %v446
    %v511 = vpack.c.b16 %v447, %v447
    %v512 = vpack.c.b16 %v448, %v448
    %v513 = vpack.c.b16 %v449, %v449
    %v514 = vpack.c.b16 %v450, %v450
    %v515 = vpack.c.b16 %v451, %v451
    %v516 = vpack.c.b16 %v452, %v452
    %v517 = vpack.c.b16 %v453, %v453
    %v518 = vpack.c.b16 %v454, %v454
    %v519 = vpack.c.b16 %v455, %v455
    %v520 = vpack.c.b16 %v456, %v456
    %v521 = vpack.c.b16 %v457, %v457
    %v522 = vpack.c.b16 %v458, %v458
    %v523 = vpack.c.b16 %v459, %v459
    %v524 = vpack.c.b16 %v460, %v460
    %v525 = vpack.c.b16 %v461, %v461
    %v526 = vpack.c.b16 %v462, %v462
    %v527 = vpack.c.b16 %v463, %v463
    %v528 = vpack.c.b16 %v464, %v464
    %v529 = vpack.c.b16 %v465, %v465
    %v530 = vpack.c.b16 %v466, %v466
    %v531 = vpack.c.b16 %v467, %v467
    %v532 = vpack.c.b16 %v468, %v468
    %v533 = vpack.c.b16 %v469, %v469
    %v534 = vpack.c.b16 %v470, %v470
    %v535 = vpack.c.b16 %v471, %v471
    %v536 = vpack.c.b16 %v472, %v472
    %v537 = vpack.c.b16 %v473, %v473
    %v538 = vpack.c.b16 %v474, %v474
    %v539 = vpack.c.b16 %v475, %v475
    %v540 = vpack.c.b16 %v476, %v476
    %605 = vst [vmem:[#allocation2] sm:$0xf] %v477
    %606 = vst [vmem:[#allocation2 + $0x4] sm:$0xf] %v478
    %607 = vst [vmem:[#allocation2 + $0x8] sm:$0xf] %v479
    %608 = vst [vmem:[#allocation2 + $0xc] sm:$0xf] %v480
    %609 = vst [vmem:[#allocation2 + $0x10] sm:$0xf] %v481
    %610 = vst [vmem:[#allocation2 + $0x14] sm:$0xf] %v482
    %611 = vst [vmem:[#allocation2 + $0x18] sm:$0xf] %v483
    %612 = vst [vmem:[#allocation2 + $0x1c] sm:$0xf] %v484
    %613 = vst [vmem:[#allocation2 + $0x20] sm:$0xf] %v485
    %614 = vst [vmem:[#allocation2 + $0x24] sm:$0xf] %v486
    %615 = vst [vmem:[#allocation2 + $0x28] sm:$0xf] %v487
    %616 = vst [vmem:[#allocation2 + $0x2c] sm:$0xf] %v488
    %617 = vst [vmem:[#allocation2 + $0x30] sm:$0xf] %v489
    %618 = vst [vmem:[#allocation2 + $0x34] sm:$0xf] %v490
    %619 = vst [vmem:[#allocation2 + $0x38] sm:$0xf] %v491
    %620 = vst [vmem:[#allocation2 + $0x3c] sm:$0xf] %v492
    %621 = vst [vmem:[#allocation2 + $0x40] sm:$0xf] %v493
    %622 = vst [vmem:[#allocation2 + $0x44] sm:$0xf] %v494
    %623 = vst [vmem:[#allocation2 + $0x48] sm:$0xf] %v495
    %624 = vst [vmem:[#allocation2 + $0x4c] sm:$0xf] %v496
    %625 = vst [vmem:[#allocation2 + $0x50] sm:$0xf] %v497
    %626 = vst [vmem:[#allocation2 + $0x54] sm:$0xf] %v498
    %627 = vst [vmem:[#allocation2 + $0x58] sm:$0xf] %v499
    %628 = vst [vmem:[#allocation2 + $0x5c] sm:$0xf] %v500
    %629 = vst [vmem:[#allocation2 + $0x60] sm:$0xf] %v501
    %630 = vst [vmem:[#allocation2 + $0x64] sm:$0xf] %v502
    %631 = vst [vmem:[#allocation2 + $0x68] sm:$0xf] %v503
    %632 = vst [vmem:[#allocation2 + $0x6c] sm:$0xf] %v504
    %633 = vst [vmem:[#allocation2 + $0x70] sm:$0xf] %v505
    %634 = vst [vmem:[#allocation2 + $0x74] sm:$0xf] %v506
    %635 = vst [vmem:[#allocation2 + $0x78] sm:$0xf] %v507
    %636 = vst [vmem:[#allocation2 + $0x7c] sm:$0xf] %v508
    %637 = vst [vmem:[#allocation2 + $0x80] sm:$0xf] %v509
    %638 = vst [vmem:[#allocation2 + $0x84] sm:$0xf] %v510
    %639 = vst [vmem:[#allocation2 + $0x88] sm:$0xf] %v511
    %640 = vst [vmem:[#allocation2 + $0x8c] sm:$0xf] %v512
    %641 = vst [vmem:[#allocation2 + $0x90] sm:$0xf] %v513
    %642 = vst [vmem:[#allocation2 + $0x94] sm:$0xf] %v514
    %643 = vst [vmem:[#allocation2 + $0x98] sm:$0xf] %v515
    %644 = vst [vmem:[#allocation2 + $0x9c] sm:$0xf] %v516
    %645 = vst [vmem:[#allocation2 + $0xa0] sm:$0xf] %v517
    %646 = vst [vmem:[#allocation2 + $0xa4] sm:$0xf] %v518
    %647 = vst [vmem:[#allocation2 + $0xa8] sm:$0xf] %v519
    %648 = vst [vmem:[#allocation2 + $0xac] sm:$0xf] %v520
    %649 = vst [vmem:[#allocation2 + $0xb0] sm:$0xf] %v521
    %650 = vst [vmem:[#allocation2 + $0xb4] sm:$0xf] %v522
    %651 = vst [vmem:[#allocation2 + $0xb8] sm:$0xf] %v523
    %652 = vst [vmem:[#allocation2 + $0xbc] sm:$0xf] %v524
    %653 = vst [vmem:[#allocation2 + $0xc0] sm:$0xf] %v525
    %654 = vst [vmem:[#allocation2 + $0xc4] sm:$0xf] %v526
    %655 = vst [vmem:[#allocation2 + $0xc8] sm:$0xf] %v527
    %656 = vst [vmem:[#allocation2 + $0xcc] sm:$0xf] %v528
    %657 = vst [vmem:[#allocation2 + $0xd0] sm:$0xf] %v529
    %658 = vst [vmem:[#allocation2 + $0xd4] sm:$0xf] %v530
    %659 = vst [vmem:[#allocation2 + $0xd8] sm:$0xf] %v531
    %660 = vst [vmem:[#allocation2 + $0xdc] sm:$0xf] %v532
    %661 = vst [vmem:[#allocation2 + $0xe0] sm:$0xf] %v533
    %662 = vst [vmem:[#allocation2 + $0xe4] sm:$0xf] %v534
    %663 = vst [vmem:[#allocation2 + $0xe8] sm:$0xf] %v535
    %664 = vst [vmem:[#allocation2 + $0xec] sm:$0xf] %v536
    %665 = vst [vmem:[#allocation2 + $0xf0] sm:$0xf] %v537
    %666 = vst [vmem:[#allocation2 + $0xf4] sm:$0xf] %v538
    %667 = vst [vmem:[#allocation2 + $0xf8] sm:$0xf] %v539
    %668 = vst [vmem:[#allocation2 + $0xfc] sm:$0xf] %v540
    // Predicated region
    $region14: #{conv_bn_act.3} parent=1 // pred_check
      _
    $region15: #{conv_bn_act.3} parent=1 // pred_check_branch
      %670 = sbr.rel (0) target = $region17
    $region16: #{conv_bn_act.3} parent=1 // pred_region
      %s672 = ssub.s32 4096, 4096
      %673 = vsyncadd [#allocation3], %s672
      %s674 = sshll.u32 [#allocation2], 4
      %s675 = int_to_ptr.vmem [resolvable:$true] %s674
      %680 = dma.vmem_to_hbm [thread:$0]  %s675, 4096, %s3, [#allocation3], 64, 64, 4
    $region17: #{conv_bn_act.3} parent=1 // pred_fallthru
      _
    // Predicated region
    $region18: #{conv_bn_act.3} parent=1 // pred_check
      _
    $region19: #{conv_bn_act.3} parent=1 // pred_check_branch
      %682 = sbr.rel (0) target = $region21
    $region20: #{conv_bn_act.3} parent=1 // pred_region
      %683 = dma.done [#allocation3], 4096
    $region21: #{conv_bn_act.3} parent=1 // pred_fallthru
      _
    %684 = vsyncpa [#allocation3], 1

// kernel: conv_bn_act.2
$region0: #{conv_bn_act.2}
  #allocation0 [shape = 'u32[]', space=smem, size = 0x4, offset = 0x4, fixed_abs, tag = 'smem constant byte address 0x4 - core index']
  #allocation1 [shape = 'u32[144,128]{1,0:T(1,128)}', space=vmem, size = 0x12000, scoped, tag = 'internal scratch']
  #allocation2 [shape = 'f32[512,128]{1,0:T(8,128)}', space=vmem, size = 0x40000, scoped, tag = 'scratch operand']
  %s0 = inlined_call_operand.vmem [shape: bf16[512,128], index: 0, kind: input, shape index: {}]
  %s1 = inlined_call_operand.vmem [shape: bf16[128,128], index: 1, kind: input, shape index: {}]
  %s2 = inlined_call_operand.vmem [shape: bf16[512,128], index: 2, kind: output, shape index: {0}]
  %s3 = inlined_call_operand.vmem [shape: f32[1,8,128], index: 3, kind: output, shape index: {1}]
  %s4 = inlined_call_operand.vmem [shape: f32[1,8,128], index: 4, kind: output, shape index: {2}]
  %5 = xla_tuple %s2, %s3, %s4
  %s6 = sld [smem:[#allocation0]]
  $region42: #{conv_bn_act.2} parent=0
    _
  %s8 = ssub.s32 1, %s6
  %s9 = scalar_select 0, %s8, %s6
  // Predicated region
  $region2: #{conv_bn_act.2} parent=0 // pred_check
    _
  $region3: #{conv_bn_act.2} parent=0 // pred_check_branch
    %11 = sbr.rel (0) target = $region5
  $region4: #{conv_bn_act.2} parent=0 // pred_region
    _
  $region5: #{conv_bn_act.2} parent=0 // pred_fallthru
    _
  // Predicated region
  $region6: #{conv_bn_act.2} parent=0 // pred_check
    _
  $region7: #{conv_bn_act.2} parent=0 // pred_check_branch
    %13 = sbr.rel (0) target = $region9
  $region8: #{conv_bn_act.2} parent=0 // pred_region
    _
  $region9: #{conv_bn_act.2} parent=0 // pred_fallthru
    _
  %p15 = scmp.eq.s32.totalorder 0, 0
  // Predicated region
  $region10: #{conv_bn_act.2} parent=0 // pred_check
    %p16 = pneg %p15
  $region11: #{conv_bn_act.2} parent=0 // pred_check_branch
    %18 = sbr.rel (%p16) target = $region13
  $region12: #{conv_bn_act.2} parent=0 // pred_region
    %19 = vst [vmem:[#allocation2] sm:$0xff] 0.0
    %20 = vst [vmem:[#allocation2 + $0x8] sm:$0xff] 0.0
    %21 = vst [vmem:[#allocation2 + $0x10] sm:$0xff] 0.0
    %22 = vst [vmem:[#allocation2 + $0x18] sm:$0xff] 0.0
    %23 = vst [vmem:[#allocation2 + $0x20] sm:$0xff] 0.0
    %24 = vst [vmem:[#allocation2 + $0x28] sm:$0xff] 0.0
    %25 = vst [vmem:[#allocation2 + $0x30] sm:$0xff] 0.0
    %26 = vst [vmem:[#allocation2 + $0x38] sm:$0xff] 0.0
    %27 = vst [vmem:[#allocation2 + $0x40] sm:$0xff] 0.0
    %28 = vst [vmem:[#allocation2 + $0x48] sm:$0xff] 0.0
    %29 = vst [vmem:[#allocation2 + $0x50] sm:$0xff] 0.0
    %30 = vst [vmem:[#allocation2 + $0x58] sm:$0xff] 0.0
    %31 = vst [vmem:[#allocation2 + $0x60] sm:$0xff] 0.0
    %32 = vst [vmem:[#allocation2 + $0x68] sm:$0xff] 0.0
    %33 = vst [vmem:[#allocation2 + $0x70] sm:$0xff] 0.0
    %34 = vst [vmem:[#allocation2 + $0x78] sm:$0xff] 0.0
    %35 = vst [vmem:[#allocation2 + $0x80] sm:$0xff] 0.0
    %36 = vst [vmem:[#allocation2 + $0x88] sm:$0xff] 0.0
    %37 = vst [vmem:[#allocation2 + $0x90] sm:$0xff] 0.0
    %38 = vst [vmem:[#allocation2 + $0x98] sm:$0xff] 0.0
    %39 = vst [vmem:[#allocation2 + $0xa0] sm:$0xff] 0.0
    %40 = vst [vmem:[#allocation2 + $0xa8] sm:$0xff] 0.0
    %41 = vst [vmem:[#allocation2 + $0xb0] sm:$0xff] 0.0
    %42 = vst [vmem:[#allocation2 + $0xb8] sm:$0xff] 0.0
    %43 = vst [vmem:[#allocation2 + $0xc0] sm:$0xff] 0.0
    %44 = vst [vmem:[#allocation2 + $0xc8] sm:$0xff] 0.0
    %45 = vst [vmem:[#allocation2 + $0xd0] sm:$0xff] 0.0
    %46 = vst [vmem:[#allocation2 + $0xd8] sm:$0xff] 0.0
    %47 = vst [vmem:[#allocation2 + $0xe0] sm:$0xff] 0.0
    %48 = vst [vmem:[#allocation2 + $0xe8] sm:$0xff] 0.0
    %49 = vst [vmem:[#allocation2 + $0xf0] sm:$0xff] 0.0
    %50 = vst [vmem:[#allocation2 + $0xf8] sm:$0xff] 0.0
    %51 = vst [vmem:[#allocation2 + $0x100] sm:$0xff] 0.0
    %52 = vst [vmem:[#allocation2 + $0x108] sm:$0xff] 0.0
    %53 = vst [vmem:[#allocation2 + $0x110] sm:$0xff] 0.0
    %54 = vst [vmem:[#allocation2 + $0x118] sm:$0xff] 0.0
    %55 = vst [vmem:[#allocation2 + $0x120] sm:$0xff] 0.0
    %56 = vst [vmem:[#allocation2 + $0x128] sm:$0xff] 0.0
    %57 = vst [vmem:[#allocation2 + $0x130] sm:$0xff] 0.0
    %58 = vst [vmem:[#allocation2 + $0x138] sm:$0xff] 0.0
    %59 = vst [vmem:[#allocation2 + $0x140] sm:$0xff] 0.0
    %60 = vst [vmem:[#allocation2 + $0x148] sm:$0xff] 0.0
    %61 = vst [vmem:[#allocation2 + $0x150] sm:$0xff] 0.0
    %62 = vst [vmem:[#allocation2 + $0x158] sm:$0xff] 0.0
    %63 = vst [vmem:[#allocation2 + $0x160] sm:$0xff] 0.0
    %64 = vst [vmem:[#allocation2 + $0x168] sm:$0xff] 0.0
    %65 = vst [vmem:[#allocation2 + $0x170] sm:$0xff] 0.0
    %66 = vst [vmem:[#allocation2 + $0x178] sm:$0xff] 0.0
    %67 = vst [vmem:[#allocation2 + $0x180] sm:$0xff] 0.0
    %68 = vst [vmem:[#allocation2 + $0x188] sm:$0xff] 0.0
    %69 = vst [vmem:[#allocation2 + $0x190] sm:$0xff] 0.0
    %70 = vst [vmem:[#allocation2 + $0x198] sm:$0xff] 0.0
    %71 = vst [vmem:[#allocation2 + $0x1a0] sm:$0xff] 0.0
    %72 = vst [vmem:[#allocation2 + $0x1a8] sm:$0xff] 0.0
    %73 = vst [vmem:[#allocation2 + $0x1b0] sm:$0xff] 0.0
    %74 = vst [vmem:[#allocation2 + $0x1b8] sm:$0xff] 0.0
    %75 = vst [vmem:[#allocation2 + $0x1c0] sm:$0xff] 0.0
    %76 = vst [vmem:[#allocation2 + $0x1c8] sm:$0xff] 0.0
    %77 = vst [vmem:[#allocation2 + $0x1d0] sm:$0xff] 0.0
    %78 = vst [vmem:[#allocation2 + $0x1d8] sm:$0xff] 0.0
    %79 = vst [vmem:[#allocation2 + $0x1e0] sm:$0xff] 0.0
    %80 = vst [vmem:[#allocation2 + $0x1e8] sm:$0xff] 0.0
    %81 = vst [vmem:[#allocation2 + $0x1f0] sm:$0xff] 0.0
    %82 = vst [vmem:[#allocation2 + $0x1f8] sm:$0xff] 0.0
  $region13: #{conv_bn_act.2} parent=0 // pred_fallthru
    _
  %v83 = vld [vmem:[#allocation2] sm:$0xff]
  %v84 = vld [vmem:[#allocation2 + $0x8] sm:$0xff]
  %v85 = vld [vmem:[#allocation2 + $0x10] sm:$0xff]
  %v86 = vld [vmem:[#allocation2 + $0x18] sm:$0xff]
  %v87 = vld [vmem:[#allocation2 + $0x20] sm:$0xff]
  %v88 = vld [vmem:[#allocation2 + $0x28] sm:$0xff]
  %v89 = vld [vmem:[#allocation2 + $0x30] sm:$0xff]
  %v90 = vld [vmem:[#allocation2 + $0x38] sm:$0xff]
  %v91 = vld [vmem:[#allocation2 + $0x40] sm:$0xff]
  %v92 = vld [vmem:[#allocation2 + $0x48] sm:$0xff]
  %v93 = vld [vmem:[#allocation2 + $0x50] sm:$0xff]
  %v94 = vld [vmem:[#allocation2 + $0x58] sm:$0xff]
  %v95 = vld [vmem:[#allocation2 + $0x60] sm:$0xff]
  %v96 = vld [vmem:[#allocation2 + $0x68] sm:$0xff]
  %v97 = vld [vmem:[#allocation2 + $0x70] sm:$0xff]
  %v98 = vld [vmem:[#allocation2 + $0x78] sm:$0xff]
  %v99 = vld [vmem:[#allocation2 + $0x80] sm:$0xff]
  %v100 = vld [vmem:[#allocation2 + $0x88] sm:$0xff]
  %v101 = vld [vmem:[#allocation2 + $0x90] sm:$0xff]
  %v102 = vld [vmem:[#allocation2 + $0x98] sm:$0xff]
  %v103 = vld [vmem:[#allocation2 + $0xa0] sm:$0xff]
  %v104 = vld [vmem:[#allocation2 + $0xa8] sm:$0xff]
  %v105 = vld [vmem:[#allocation2 + $0xb0] sm:$0xff]
  %v106 = vld [vmem:[#allocation2 + $0xb8] sm:$0xff]
  %v107 = vld [vmem:[#allocation2 + $0xc0] sm:$0xff]
  %v108 = vld [vmem:[#allocation2 + $0xc8] sm:$0xff]
  %v109 = vld [vmem:[#allocation2 + $0xd0] sm:$0xff]
  %v110 = vld [vmem:[#allocation2 + $0xd8] sm:$0xff]
  %v111 = vld [vmem:[#allocation2 + $0xe0] sm:$0xff]
  %v112 = vld [vmem:[#allocation2 + $0xe8] sm:$0xff]
  %v113 = vld [vmem:[#allocation2 + $0xf0] sm:$0xff]
  %v114 = vld [vmem:[#allocation2 + $0xf8] sm:$0xff]
  %v115 = vld [vmem:[#allocation2 + $0x100] sm:$0xff]
  %v116 = vld [vmem:[#allocation2 + $0x108] sm:$0xff]
  %v117 = vld [vmem:[#allocation2 + $0x110] sm:$0xff]
  %v118 = vld [vmem:[#allocation2 + $0x118] sm:$0xff]
  %v119 = vld [vmem:[#allocation2 + $0x120] sm:$0xff]
  %v120 = vld [vmem:[#allocation2 + $0x128] sm:$0xff]
  %v121 = vld [vmem:[#allocation2 + $0x130] sm:$0xff]
  %v122 = vld [vmem:[#allocation2 + $0x138] sm:$0xff]
  %v123 = vld [vmem:[#allocation2 + $0x140] sm:$0xff]
  %v124 = vld [vmem:[#allocation2 + $0x148] sm:$0xff]
  %v125 = vld [vmem:[#allocation2 + $0x150] sm:$0xff]
  %v126 = vld [vmem:[#allocation2 + $0x158] sm:$0xff]
  %v127 = vld [vmem:[#allocation2 + $0x160] sm:$0xff]
  %v128 = vld [vmem:[#allocation2 + $0x168] sm:$0xff]
  %v129 = vld [vmem:[#allocation2 + $0x170] sm:$0xff]
  %v130 = vld [vmem:[#allocation2 + $0x178] sm:$0xff]
  %v131 = vld [vmem:[#allocation2 + $0x180] sm:$0xff]
  %v132 = vld [vmem:[#allocation2 + $0x188] sm:$0xff]
  %v133 = vld [vmem:[#allocation2 + $0x190] sm:$0xff]
  %v134 = vld [vmem:[#allocation2 + $0x198] sm:$0xff]
  %v135 = vld [vmem:[#allocation2 + $0x1a0] sm:$0xff]
  %v136 = vld [vmem:[#allocation2 + $0x1a8] sm:$0xff]
  %v137 = vld [vmem:[#allocation2 + $0x1b0] sm:$0xff]
  %v138 = vld [vmem:[#allocation2 + $0x1b8] sm:$0xff]
  %v139 = vld [vmem:[#allocation2 + $0x1c0] sm:$0xff]
  %v140 = vld [vmem:[#allocation2 + $0x1c8] sm:$0xff]
  %v141 = vld [vmem:[#allocation2 + $0x1d0] sm:$0xff]
  %v142 = vld [vmem:[#allocation2 + $0x1d8] sm:$0xff]
  %v143 = vld [vmem:[#allocation2 + $0x1e0] sm:$0xff]
  %v144 = vld [vmem:[#allocation2 + $0x1e8] sm:$0xff]
  %v145 = vld [vmem:[#allocation2 + $0x1f0] sm:$0xff]
  %v146 = vld [vmem:[#allocation2 + $0x1f8] sm:$0xff]
  %v147 = vld [vmem:[%s0] sm:$0xf]
  %v148 = vld [vmem:[%s0 + $0x4] sm:$0xf]
  %v149 = vld [vmem:[%s0 + $0x8] sm:$0xf]
  %v150 = vld [vmem:[%s0 + $0xc] sm:$0xf]
  %v151 = vld [vmem:[%s0 + $0x10] sm:$0xf]
  %v152 = vld [vmem:[%s0 + $0x14] sm:$0xf]
  %v153 = vld [vmem:[%s0 + $0x18] sm:$0xf]
  %v154 = vld [vmem:[%s0 + $0x1c] sm:$0xf]
  %v155 = vld [vmem:[%s0 + $0x20] sm:$0xf]
  %v156 = vld [vmem:[%s0 + $0x24] sm:$0xf]
  %v157 = vld [vmem:[%s0 + $0x28] sm:$0xf]
  %v158 = vld [vmem:[%s0 + $0x2c] sm:$0xf]
  %v159 = vld [vmem:[%s0 + $0x30] sm:$0xf]
  %v160 = vld [vmem:[%s0 + $0x34] sm:$0xf]
  %v161 = vld [vmem:[%s0 + $0x38] sm:$0xf]
  %v162 = vld [vmem:[%s0 + $0x3c] sm:$0xf]
  %v163 = vld [vmem:[%s0 + $0x40] sm:$0xf]
  %v164 = vld [vmem:[%s0 + $0x44] sm:$0xf]
  %v165 = vld [vmem:[%s0 + $0x48] sm:$0xf]
  %v166 = vld [vmem:[%s0 + $0x4c] sm:$0xf]
  %v167 = vld [vmem:[%s0 + $0x50] sm:$0xf]
  %v168 = vld [vmem:[%s0 + $0x54] sm:$0xf]
  %v169 = vld [vmem:[%s0 + $0x58] sm:$0xf]
  %v170 = vld [vmem:[%s0 + $0x5c] sm:$0xf]
  %v171 = vld [vmem:[%s0 + $0x60] sm:$0xf]
  %v172 = vld [vmem:[%s0 + $0x64] sm:$0xf]
  %v173 = vld [vmem:[%s0 + $0x68] sm:$0xf]
  %v174 = vld [vmem:[%s0 + $0x6c] sm:$0xf]
  %v175 = vld [vmem:[%s0 + $0x70] sm:$0xf]
  %v176 = vld [vmem:[%s0 + $0x74] sm:$0xf]
  %v177 = vld [vmem:[%s0 + $0x78] sm:$0xf]
  %v178 = vld [vmem:[%s0 + $0x7c] sm:$0xf]
  %v179 = vld [vmem:[%s0 + $0x80] sm:$0xf]
  %v180 = vld [vmem:[%s0 + $0x84] sm:$0xf]
  %v181 = vld [vmem:[%s0 + $0x88] sm:$0xf]
  %v182 = vld [vmem:[%s0 + $0x8c] sm:$0xf]
  %v183 = vld [vmem:[%s0 + $0x90] sm:$0xf]
  %v184 = vld [vmem:[%s0 + $0x94] sm:$0xf]
  %v185 = vld [vmem:[%s0 + $0x98] sm:$0xf]
  %v186 = vld [vmem:[%s0 + $0x9c] sm:$0xf]
  %v187 = vld [vmem:[%s0 + $0xa0] sm:$0xf]
  %v188 = vld [vmem:[%s0 + $0xa4] sm:$0xf]
  %v189 = vld [vmem:[%s0 + $0xa8] sm:$0xf]
  %v190 = vld [vmem:[%s0 + $0xac] sm:$0xf]
  %v191 = vld [vmem:[%s0 + $0xb0] sm:$0xf]
  %v192 = vld [vmem:[%s0 + $0xb4] sm:$0xf]
  %v193 = vld [vmem:[%s0 + $0xb8] sm:$0xf]
  %v194 = vld [vmem:[%s0 + $0xbc] sm:$0xf]
  %v195 = vld [vmem:[%s0 + $0xc0] sm:$0xf]
  %v196 = vld [vmem:[%s0 + $0xc4] sm:$0xf]
  %v197 = vld [vmem:[%s0 + $0xc8] sm:$0xf]
  %v198 = vld [vmem:[%s0 + $0xcc] sm:$0xf]
  %v199 = vld [vmem:[%s0 + $0xd0] sm:$0xf]
  %v200 = vld [vmem:[%s0 + $0xd4] sm:$0xf]
  %v201 = vld [vmem:[%s0 + $0xd8] sm:$0xf]
  %v202 = vld [vmem:[%s0 + $0xdc] sm:$0xf]
  %v203 = vld [vmem:[%s0 + $0xe0] sm:$0xf]
  %v204 = vld [vmem:[%s0 + $0xe4] sm:$0xf]
  %v205 = vld [vmem:[%s0 + $0xe8] sm:$0xf]
  %v206 = vld [vmem:[%s0 + $0xec] sm:$0xf]
  %v207 = vld [vmem:[%s0 + $0xf0] sm:$0xf]
  %v208 = vld [vmem:[%s0 + $0xf4] sm:$0xf]
  %v209 = vld [vmem:[%s0 + $0xf8] sm:$0xf]
  %v210 = vld [vmem:[%s0 + $0xfc] sm:$0xf]
  %v211 = vld [vmem:[%s1] sm:$0xf]
  %v212 = vld [vmem:[%s1 + $0x4] sm:$0xf]
  %v213 = vld [vmem:[%s1 + $0x8] sm:$0xf]
  %v214 = vld [vmem:[%s1 + $0xc] sm:$0xf]
  %v215 = vld [vmem:[%s1 + $0x10] sm:$0xf]
  %v216 = vld [vmem:[%s1 + $0x14] sm:$0xf]
  %v217 = vld [vmem:[%s1 + $0x18] sm:$0xf]
  %v218 = vld [vmem:[%s1 + $0x1c] sm:$0xf]
  %v219 = vld [vmem:[%s1 + $0x20] sm:$0xf]
  %v220 = vld [vmem:[%s1 + $0x24] sm:$0xf]
  %v221 = vld [vmem:[%s1 + $0x28] sm:$0xf]
  %v222 = vld [vmem:[%s1 + $0x2c] sm:$0xf]
  %v223 = vld [vmem:[%s1 + $0x30] sm:$0xf]
  %v224 = vld [vmem:[%s1 + $0x34] sm:$0xf]
  %v225 = vld [vmem:[%s1 + $0x38] sm:$0xf]
  %v226 = vld [vmem:[%s1 + $0x3c] sm:$0xf]
  %v291 = vunpack.c.l.b16 %v147
  %v292 = vunpack.c.l.b16 %v148
  %v293 = vunpack.c.l.b16 %v149
  %v294 = vunpack.c.l.b16 %v150
  %v295 = vunpack.c.l.b16 %v151
  %v296 = vunpack.c.l.b16 %v152
  %v297 = vunpack.c.l.b16 %v153
  %v298 = vunpack.c.l.b16 %v154
  %v299 = vunpack.c.l.b16 %v155
  %v300 = vunpack.c.l.b16 %v156
  %v301 = vunpack.c.l.b16 %v157
  %v302 = vunpack.c.l.b16 %v158
  %v303 = vunpack.c.l.b16 %v159
  %v304 = vunpack.c.l.b16 %v160
  %v305 = vunpack.c.l.b16 %v161
  %v306 = vunpack.c.l.b16 %v162
  %v307 = vunpack.c.l.b16 %v163
  %v308 = vunpack.c.l.b16 %v164
  %v309 = vunpack.c.l.b16 %v165
  %v310 = vunpack.c.l.b16 %v166
  %v311 = vunpack.c.l.b16 %v167
  %v312 = vunpack.c.l.b16 %v168
  %v313 = vunpack.c.l.b16 %v169
  %v314 = vunpack.c.l.b16 %v170
  %v315 = vunpack.c.l.b16 %v171
  %v316 = vunpack.c.l.b16 %v172
  %v317 = vunpack.c.l.b16 %v173
  %v318 = vunpack.c.l.b16 %v174
  %v319 = vunpack.c.l.b16 %v175
  %v320 = vunpack.c.l.b16 %v176
  %v321 = vunpack.c.l.b16 %v177
  %v322 = vunpack.c.l.b16 %v178
  %v323 = vunpack.c.l.b16 %v179
  %v324 = vunpack.c.l.b16 %v180
  %v325 = vunpack.c.l.b16 %v181
  %v326 = vunpack.c.l.b16 %v182
  %v327 = vunpack.c.l.b16 %v183
  %v328 = vunpack.c.l.b16 %v184
  %v329 = vunpack.c.l.b16 %v185
  %v330 = vunpack.c.l.b16 %v186
  %v331 = vunpack.c.l.b16 %v187
  %v332 = vunpack.c.l.b16 %v188
  %v333 = vunpack.c.l.b16 %v189
  %v334 = vunpack.c.l.b16 %v190
  %v335 = vunpack.c.l.b16 %v191
  %v336 = vunpack.c.l.b16 %v192
  %v337 = vunpack.c.l.b16 %v193
  %v338 = vunpack.c.l.b16 %v194
  %v339 = vunpack.c.l.b16 %v195
  %v340 = vunpack.c.l.b16 %v196
  %v341 = vunpack.c.l.b16 %v197
  %v342 = vunpack.c.l.b16 %v198
  %v343 = vunpack.c.l.b16 %v199
  %v344 = vunpack.c.l.b16 %v200
  %v345 = vunpack.c.l.b16 %v201
  %v346 = vunpack.c.l.b16 %v202
  %v347 = vunpack.c.l.b16 %v203
  %v348 = vunpack.c.l.b16 %v204
  %v349 = vunpack.c.l.b16 %v205
  %v350 = vunpack.c.l.b16 %v206
  %v351 = vunpack.c.l.b16 %v207
  %v352 = vunpack.c.l.b16 %v208
  %v353 = vunpack.c.l.b16 %v209
  %v354 = vunpack.c.l.b16 %v210
  %v355 = vpack.c.b16 %v292, %v291
  %v356 = vpack.c.b16 %v294, %v293
  %v357 = vpack.c.b16 %v296, %v295
  %v358 = vpack.c.b16 %v298, %v297
  %v359 = vpack.c.b16 %v300, %v299
  %v360 = vpack.c.b16 %v302, %v301
  %v361 = vpack.c.b16 %v304, %v303
  %v362 = vpack.c.b16 %v306, %v305
  %v363 = vpack.c.b16 %v308, %v307
  %v364 = vpack.c.b16 %v310, %v309
  %v365 = vpack.c.b16 %v312, %v311
  %v366 = vpack.c.b16 %v314, %v313
  %v367 = vpack.c.b16 %v316, %v315
  %v368 = vpack.c.b16 %v318, %v317
  %v369 = vpack.c.b16 %v320, %v319
  %v370 = vpack.c.b16 %v322, %v321
  %v371 = vpack.c.b16 %v324, %v323
  %v372 = vpack.c.b16 %v326, %v325
  %v373 = vpack.c.b16 %v328, %v327
  %v374 = vpack.c.b16 %v330, %v329
  %v375 = vpack.c.b16 %v332, %v331
  %v376 = vpack.c.b16 %v334, %v333
  %v377 = vpack.c.b16 %v336, %v335
  %v378 = vpack.c.b16 %v338, %v337
  %v379 = vpack.c.b16 %v340, %v339
  %v380 = vpack.c.b16 %v342, %v341
  %v381 = vpack.c.b16 %v344, %v343
  %v382 = vpack.c.b16 %v346, %v345
  %v383 = vpack.c.b16 %v348, %v347
  %v384 = vpack.c.b16 %v350, %v349
  %v385 = vpack.c.b16 %v352, %v351
  %v386 = vpack.c.b16 %v354, %v353
  %v435 = vunpack.c.l.b16 %v211
  %v436 = vunpack.c.l.b16 %v212
  %v437 = vunpack.c.l.b16 %v213
  %v438 = vunpack.c.l.b16 %v214
  %v439 = vunpack.c.l.b16 %v215
  %v440 = vunpack.c.l.b16 %v216
  %v441 = vunpack.c.l.b16 %v217
  %v442 = vunpack.c.l.b16 %v218
  %v443 = vunpack.c.l.b16 %v219
  %v444 = vunpack.c.l.b16 %v220
  %v445 = vunpack.c.l.b16 %v221
  %v446 = vunpack.c.l.b16 %v222
  %v447 = vunpack.c.l.b16 %v223
  %v448 = vunpack.c.l.b16 %v224
  %v449 = vunpack.c.l.b16 %v225
  %v450 = vunpack.c.l.b16 %v226
  %v451 = vpack.c.b16 %v436, %v435
  %v452 = vpack.c.b16 %v438, %v437
  %v453 = vpack.c.b16 %v440, %v439
  %v454 = vpack.c.b16 %v442, %v441
  %v455 = vpack.c.b16 %v444, %v443
  %v456 = vpack.c.b16 %v446, %v445
  %v457 = vpack.c.b16 %v448, %v447
  %v458 = vpack.c.b16 %v450, %v449
  %467 = vmatprep.subr.bf16.mxu0 0
  %468 = vmatpush1.bf16.msra.mxu0 %v458
  %469 = vmatprep.subr.bf16.mxu0 0
  %470 = vmatpush1.bf16.msra.mxu0 %v457
  %471 = vmatprep.subr.bf16.mxu0 0
  %472 = vmatpush1.bf16.msra.mxu0 %v456
  %473 = vmatprep.subr.bf16.mxu0 0
  %474 = vmatpush1.bf16.msra.mxu0 %v455
  %475 = vmatprep.subr.bf16.mxu0 0
  %476 = vmatpush1.bf16.msra.mxu0 %v454
  %477 = vmatprep.subr.bf16.mxu0 0
  %478 = vmatpush1.bf16.msra.mxu0 %v453
  %479 = vmatprep.subr.bf16.mxu0 0
  %480 = vmatpush1.bf16.msra.mxu0 %v452
  %481 = vmatprep.subr.bf16.mxu0 0
  %482 = vmatpush1.bf16.msra.mxu0 %v451
  %483 = vmatprep.subr.bf16.mxu0 0
  %484 = vmatpush2.bf16.msra.mxu0 0
  %485 = vmatprep.subr.bf16.mxu0 0
  %486 = vmatpush2.bf16.msra.mxu0 0
  %487 = vmatprep.subr.bf16.mxu0 0
  %488 = vmatpush2.bf16.msra.mxu0 0
  %489 = vmatprep.subr.bf16.mxu0 0
  %490 = vmatpush2.bf16.msra.mxu0 0
  %491 = vmatprep.subr.bf16.mxu0 0
  %492 = vmatpush2.bf16.msra.mxu0 0
  %493 = vmatprep.subr.bf16.mxu0 0
  %494 = vmatpush2.bf16.msra.mxu0 0
  %495 = vmatprep.subr.bf16.mxu0 0
  %496 = vmatpush2.bf16.msra.mxu0 0
  %497 = vmatprep.subr.bf16.mxu0 0
  %498 = vmatpush2.bf16.msra.mxu0 0
  %499 = vmatprep.mubr.bf16.mxu0 0
  %500 = vmatmul.mubr.bf16.gmra.mxu0 %v355
  %v501 = vpop.f32.mrf.mxu0
  %v502 = vadd.f32 0.0, %v501
  %v503 = vpop.f32.mrf.mxu0
  %v504 = vpop.f32.mrf.mxu0
  %v505 = vadd.f32 0.0, %v504
  %v506 = vpop.f32.mrf.mxu0
  %507 = vmatprep.mubr.bf16.mxu0 0
  %508 = vmatmul.mubr.bf16.gmra.mxu0 %v356
  %v509 = vpop.f32.mrf.mxu0
  %v510 = vadd.f32 0.0, %v509
  %v511 = vpop.f32.mrf.mxu0
  %v512 = vpop.f32.mrf.mxu0
  %v513 = vadd.f32 0.0, %v512
  %v514 = vpop.f32.mrf.mxu0
  %515 = vmatprep.mubr.bf16.mxu0 0
  %516 = vmatmul.mubr.bf16.gmra.mxu0 %v357
  %v517 = vpop.f32.mrf.mxu0
  %v518 = vadd.f32 0.0, %v517
  %v519 = vpop.f32.mrf.mxu0
  %v520 = vpop.f32.mrf.mxu0
  %v521 = vadd.f32 0.0, %v520
  %v522 = vpop.f32.mrf.mxu0
  %523 = vmatprep.mubr.bf16.mxu0 0
  %524 = vmatmul.mubr.bf16.gmra.mxu0 %v358
  %v525 = vpop.f32.mrf.mxu0
  %v526 = vadd.f32 0.0, %v525
  %v527 = vpop.f32.mrf.mxu0
  %v528 = vpop.f32.mrf.mxu0
  %v529 = vadd.f32 0.0, %v528
  %v530 = vpop.f32.mrf.mxu0
  %531 = vmatprep.mubr.bf16.mxu0 0
  %532 = vmatmul.mubr.bf16.gmra.mxu0 %v359
  %v533 = vpop.f32.mrf.mxu0
  %v534 = vadd.f32 0.0, %v533
  %v535 = vpop.f32.mrf.mxu0
  %v536 = vpop.f32.mrf.mxu0
  %v537 = vadd.f32 0.0, %v536
  %v538 = vpop.f32.mrf.mxu0
  %539 = vmatprep.mubr.bf16.mxu0 0
  %540 = vmatmul.mubr.bf16.gmra.mxu0 %v360
  %v541 = vpop.f32.mrf.mxu0
  %v542 = vadd.f32 0.0, %v541
  %v543 = vpop.f32.mrf.mxu0
  %v544 = vpop.f32.mrf.mxu0
  %v545 = vadd.f32 0.0, %v544
  %v546 = vpop.f32.mrf.mxu0
  %547 = vmatprep.mubr.bf16.mxu0 0
  %548 = vmatmul.mubr.bf16.gmra.mxu0 %v361
  %v549 = vpop.f32.mrf.mxu0
  %v550 = vadd.f32 0.0, %v549
  %v551 = vpop.f32.mrf.mxu0
  %v552 = vpop.f32.mrf.mxu0
  %v553 = vadd.f32 0.0, %v552
  %v554 = vpop.f32.mrf.mxu0
  %555 = vmatprep.mubr.bf16.mxu0 0
  %556 = vmatmul.mubr.bf16.gmra.mxu0 %v362
  %v557 = vpop.f32.mrf.mxu0
  %v558 = vadd.f32 0.0, %v557
  %v559 = vpop.f32.mrf.mxu0
  %v560 = vpop.f32.mrf.mxu0
  %v561 = vadd.f32 0.0, %v560
  %v562 = vpop.f32.mrf.mxu0
  %563 = vmatprep.mubr.bf16.mxu0 0
  %564 = vmatmul.mubr.bf16.gmra.mxu0 %v363
  %v565 = vpop.f32.mrf.mxu0
  %v566 = vadd.f32 0.0, %v565
  %v567 = vpop.f32.mrf.mxu0
  %v568 = vpop.f32.mrf.mxu0
  %v569 = vadd.f32 0.0, %v568
  %v570 = vpop.f32.mrf.mxu0
  %571 = vmatprep.mubr.bf16.mxu0 0
  %572 = vmatmul.mubr.bf16.gmra.mxu0 %v364
  %v573 = vpop.f32.mrf.mxu0
  %v574 = vadd.f32 0.0, %v573
  %v575 = vpop.f32.mrf.mxu0
  %v576 = vpop.f32.mrf.mxu0
  %v577 = vadd.f32 0.0, %v576
  %v578 = vpop.f32.mrf.mxu0
  %579 = vmatprep.mubr.bf16.mxu0 0
  %580 = vmatmul.mubr.bf16.gmra.mxu0 %v365
  %v581 = vpop.f32.mrf.mxu0
  %v582 = vadd.f32 0.0, %v581
  %v583 = vpop.f32.mrf.mxu0
  %v584 = vpop.f32.mrf.mxu0
  %v585 = vadd.f32 0.0, %v584
  %v586 = vpop.f32.mrf.mxu0
  %587 = vmatprep.mubr.bf16.mxu0 0
  %588 = vmatmul.mubr.bf16.gmra.mxu0 %v366
  %v589 = vpop.f32.mrf.mxu0
  %v590 = vadd.f32 0.0, %v589
  %v591 = vpop.f32.mrf.mxu0
  %v592 = vpop.f32.mrf.mxu0
  %v593 = vadd.f32 0.0, %v592
  %v594 = vpop.f32.mrf.mxu0
  %595 = vmatprep.mubr.bf16.mxu0 0
  %596 = vmatmul.mubr.bf16.gmra.mxu0 %v367
  %v597 = vpop.f32.mrf.mxu0
  %v598 = vadd.f32 0.0, %v597
  %v599 = vpop.f32.mrf.mxu0
  %v600 = vpop.f32.mrf.mxu0
  %v601 = vadd.f32 0.0, %v600
  %v602 = vpop.f32.mrf.mxu0
  %603 = vmatprep.mubr.bf16.mxu0 0
  %604 = vmatmul.mubr.bf16.gmra.mxu0 %v368
  %v605 = vpop.f32.mrf.mxu0
  %v606 = vadd.f32 0.0, %v605
  %v607 = vpop.f32.mrf.mxu0
  %v608 = vpop.f32.mrf.mxu0
  %v609 = vadd.f32 0.0, %v608
  %v610 = vpop.f32.mrf.mxu0
  %611 = vmatprep.mubr.bf16.mxu0 0
  %612 = vmatmul.mubr.bf16.gmra.mxu0 %v369
  %v613 = vpop.f32.mrf.mxu0
  %v614 = vadd.f32 0.0, %v613
  %v615 = vpop.f32.mrf.mxu0
  %v616 = vpop.f32.mrf.mxu0
  %v617 = vadd.f32 0.0, %v616
  %v618 = vpop.f32.mrf.mxu0
  %619 = vmatprep.mubr.bf16.mxu0 0
  %620 = vmatmul.mubr.bf16.gmra.mxu0 %v370
  %v621 = vpop.f32.mrf.mxu0
  %v622 = vadd.f32 0.0, %v621
  %v623 = vpop.f32.mrf.mxu0
  %v624 = vpop.f32.mrf.mxu0
  %v625 = vadd.f32 0.0, %v624
  %v626 = vpop.f32.mrf.mxu0
  %627 = vmatprep.mubr.bf16.mxu0 0
  %628 = vmatmul.mubr.bf16.gmra.mxu0 %v371
  %v629 = vpop.f32.mrf.mxu0
  %v630 = vadd.f32 0.0, %v629
  %v631 = vpop.f32.mrf.mxu0
  %v632 = vpop.f32.mrf.mxu0
  %v633 = vadd.f32 0.0, %v632
  %v634 = vpop.f32.mrf.mxu0
  %635 = vmatprep.mubr.bf16.mxu0 0
  %636 = vmatmul.mubr.bf16.gmra.mxu0 %v372
  %v637 = vpop.f32.mrf.mxu0
  %v638 = vadd.f32 0.0, %v637
  %v639 = vpop.f32.mrf.mxu0
  %v640 = vpop.f32.mrf.mxu0
  %v641 = vadd.f32 0.0, %v640
  %v642 = vpop.f32.mrf.mxu0
  %643 = vmatprep.mubr.bf16.mxu0 0
  %644 = vmatmul.mubr.bf16.gmra.mxu0 %v373
  %v645 = vpop.f32.mrf.mxu0
  %v646 = vadd.f32 0.0, %v645
  %v647 = vpop.f32.mrf.mxu0
  %v648 = vpop.f32.mrf.mxu0
  %v649 = vadd.f32 0.0, %v648
  %v650 = vpop.f32.mrf.mxu0
  %651 = vmatprep.mubr.bf16.mxu0 0
  %652 = vmatmul.mubr.bf16.gmra.mxu0 %v374
  %v653 = vpop.f32.mrf.mxu0
  %v654 = vadd.f32 0.0, %v653
  %v655 = vpop.f32.mrf.mxu0
  %v656 = vpop.f32.mrf.mxu0
  %v657 = vadd.f32 0.0, %v656
  %v658 = vpop.f32.mrf.mxu0
  %659 = vmatprep.mubr.bf16.mxu0 0
  %660 = vmatmul.mubr.bf16.gmra.mxu0 %v375
  %v661 = vpop.f32.mrf.mxu0
  %v662 = vadd.f32 0.0, %v661
  %v663 = vpop.f32.mrf.mxu0
  %v664 = vpop.f32.mrf.mxu0
  %v665 = vadd.f32 0.0, %v664
  %v666 = vpop.f32.mrf.mxu0
  %667 = vmatprep.mubr.bf16.mxu0 0
  %668 = vmatmul.mubr.bf16.gmra.mxu0 %v376
  %v669 = vpop.f32.mrf.mxu0
  %v670 = vadd.f32 0.0, %v669
  %v671 = vpop.f32.mrf.mxu0
  %v672 = vpop.f32.mrf.mxu0
  %v673 = vadd.f32 0.0, %v672
  %v674 = vpop.f32.mrf.mxu0
  %675 = vmatprep.mubr.bf16.mxu0 0
  %676 = vmatmul.mubr.bf16.gmra.mxu0 %v377
  %v677 = vpop.f32.mrf.mxu0
  %v678 = vadd.f32 0.0, %v677
  %v679 = vpop.f32.mrf.mxu0
  %v680 = vpop.f32.mrf.mxu0
  %v681 = vadd.f32 0.0, %v680
  %v682 = vpop.f32.mrf.mxu0
  %683 = vmatprep.mubr.bf16.mxu0 0
  %684 = vmatmul.mubr.bf16.gmra.mxu0 %v378
  %v685 = vpop.f32.mrf.mxu0
  %v686 = vadd.f32 0.0, %v685
  %v687 = vpop.f32.mrf.mxu0
  %v688 = vpop.f32.mrf.mxu0
  %v689 = vadd.f32 0.0, %v688
  %v690 = vpop.f32.mrf.mxu0
  %691 = vmatprep.mubr.bf16.mxu0 0
  %692 = vmatmul.mubr.bf16.gmra.mxu0 %v379
  %v693 = vpop.f32.mrf.mxu0
  %v694 = vadd.f32 0.0, %v693
  %v695 = vpop.f32.mrf.mxu0
  %v696 = vpop.f32.mrf.mxu0
  %v697 = vadd.f32 0.0, %v696
  %v698 = vpop.f32.mrf.mxu0
  %699 = vmatprep.mubr.bf16.mxu0 0
  %700 = vmatmul.mubr.bf16.gmra.mxu0 %v380
  %v701 = vpop.f32.mrf.mxu0
  %v702 = vadd.f32 0.0, %v701
  %v703 = vpop.f32.mrf.mxu0
  %v704 = vpop.f32.mrf.mxu0
  %v705 = vadd.f32 0.0, %v704
  %v706 = vpop.f32.mrf.mxu0
  %707 = vmatprep.mubr.bf16.mxu0 0
  %708 = vmatmul.mubr.bf16.gmra.mxu0 %v381
  %v709 = vpop.f32.mrf.mxu0
  %v710 = vadd.f32 0.0, %v709
  %v711 = vpop.f32.mrf.mxu0
  %v712 = vpop.f32.mrf.mxu0
  %v713 = vadd.f32 0.0, %v712
  %v714 = vpop.f32.mrf.mxu0
  %715 = vmatprep.mubr.bf16.mxu0 0
  %716 = vmatmul.mubr.bf16.gmra.mxu0 %v382
  %v717 = vpop.f32.mrf.mxu0
  %v718 = vadd.f32 0.0, %v717
  %v719 = vpop.f32.mrf.mxu0
  %v720 = vpop.f32.mrf.mxu0
  %v721 = vadd.f32 0.0, %v720
  %v722 = vpop.f32.mrf.mxu0
  %723 = vmatprep.mubr.bf16.mxu0 0
  %724 = vmatmul.mubr.bf16.gmra.mxu0 %v383
  %v725 = vpop.f32.mrf.mxu0
  %v726 = vadd.f32 0.0, %v725
  %v727 = vpop.f32.mrf.mxu0
  %v728 = vpop.f32.mrf.mxu0
  %v729 = vadd.f32 0.0, %v728
  %v730 = vpop.f32.mrf.mxu0
  %731 = vmatprep.mubr.bf16.mxu0 0
  %732 = vmatmul.mubr.bf16.gmra.mxu0 %v384
  %v733 = vpop.f32.mrf.mxu0
  %v734 = vadd.f32 0.0, %v733
  %v735 = vpop.f32.mrf.mxu0
  %v736 = vpop.f32.mrf.mxu0
  %v737 = vadd.f32 0.0, %v736
  %v738 = vpop.f32.mrf.mxu0
  %739 = vmatprep.mubr.bf16.mxu0 0
  %740 = vmatmul.mubr.bf16.gmra.mxu0 %v385
  %v741 = vpop.f32.mrf.mxu0
  %v742 = vadd.f32 0.0, %v741
  %v743 = vpop.f32.mrf.mxu0
  %v744 = vpop.f32.mrf.mxu0
  %v745 = vadd.f32 0.0, %v744
  %v746 = vpop.f32.mrf.mxu0
  %747 = vmatprep.mubr.bf16.mxu0 0
  %748 = vmatmul.mubr.bf16.gmra.mxu0 %v386
  %v749 = vpop.f32.mrf.mxu0
  %v750 = vadd.f32 0.0, %v749
  %v751 = vpop.f32.mrf.mxu0
  %v752 = vpop.f32.mrf.mxu0
  %v753 = vadd.f32 0.0, %v752
  %v754 = vpop.f32.mrf.mxu0
  %755 = vdwg.mxu0
  %v756 = vadd.f32 %v83, %v502
  %v757 = vadd.f32 %v84, %v505
  %v758 = vadd.f32 %v85, %v510
  %v759 = vadd.f32 %v86, %v513
  %v760 = vadd.f32 %v87, %v518
  %v761 = vadd.f32 %v88, %v521
  %v762 = vadd.f32 %v89, %v526
  %v763 = vadd.f32 %v90, %v529
  %v764 = vadd.f32 %v91, %v534
  %v765 = vadd.f32 %v92, %v537
  %v766 = vadd.f32 %v93, %v542
  %v767 = vadd.f32 %v94, %v545
  %v768 = vadd.f32 %v95, %v550
  %v769 = vadd.f32 %v96, %v553
  %v770 = vadd.f32 %v97, %v558
  %v771 = vadd.f32 %v98, %v561
  %v772 = vadd.f32 %v99, %v566
  %v773 = vadd.f32 %v100, %v569
  %v774 = vadd.f32 %v101, %v574
  %v775 = vadd.f32 %v102, %v577
  %v776 = vadd.f32 %v103, %v582
  %v777 = vadd.f32 %v104, %v585
  %v778 = vadd.f32 %v105, %v590
  %v779 = vadd.f32 %v106, %v593
  %v780 = vadd.f32 %v107, %v598
  %v781 = vadd.f32 %v108, %v601
  %v782 = vadd.f32 %v109, %v606
  %v783 = vadd.f32 %v110, %v609
  %v784 = vadd.f32 %v111, %v614
  %v785 = vadd.f32 %v112, %v617
  %v786 = vadd.f32 %v113, %v622
  %v787 = vadd.f32 %v114, %v625
  %v788 = vadd.f32 %v115, %v630
  %v789 = vadd.f32 %v116, %v633
  %v790 = vadd.f32 %v117, %v638
  %v791 = vadd.f32 %v118, %v641
  %v792 = vadd.f32 %v119, %v646
  %v793 = vadd.f32 %v120, %v649
  %v794 = vadd.f32 %v121, %v654
  %v795 = vadd.f32 %v122, %v657
  %v796 = vadd.f32 %v123, %v662
  %v797 = vadd.f32 %v124, %v665
  %v798 = vadd.f32 %v125, %v670
  %v799 = vadd.f32 %v126, %v673
  %v800 = vadd.f32 %v127, %v678
  %v801 = vadd.f32 %v128, %v681
  %v802 = vadd.f32 %v129, %v686
  %v803 = vadd.f32 %v130, %v689
  %v804 = vadd.f32 %v131, %v694
  %v805 = vadd.f32 %v132, %v697
  %v806 = vadd.f32 %v133, %v702
  %v807 = vadd.f32 %v134, %v705
  %v808 = vadd.f32 %v135, %v710
  %v809 = vadd.f32 %v136, %v713
  %v810 = vadd.f32 %v137, %v718
  %v811 = vadd.f32 %v138, %v721
  %v812 = vadd.f32 %v139, %v726
  %v813 = vadd.f32 %v140, %v729
  %v814 = vadd.f32 %v141, %v734
  %v815 = vadd.f32 %v142, %v737
  %v816 = vadd.f32 %v143, %v742
  %v817 = vadd.f32 %v144, %v745
  %v818 = vadd.f32 %v145, %v750
  %v819 = vadd.f32 %v146, %v753
  %820 = vst [vmem:[#allocation2] sm:$0xff] %v756
  %821 = vst [vmem:[#allocation2 + $0x8] sm:$0xff] %v757
  %822 = vst [vmem:[#allocation2 + $0x10] sm:$0xff] %v758
  %823 = vst [vmem:[#allocation2 + $0x18] sm:$0xff] %v759
  %824 = vst [vmem:[#allocation2 + $0x20] sm:$0xff] %v760
  %825 = vst [vmem:[#allocation2 + $0x28] sm:$0xff] %v761
  %826 = vst [vmem:[#allocation2 + $0x30] sm:$0xff] %v762
  %827 = vst [vmem:[#allocation2 + $0x38] sm:$0xff] %v763
  %828 = vst [vmem:[#allocation2 + $0x40] sm:$0xff] %v764
  %829 = vst [vmem:[#allocation2 + $0x48] sm:$0xff] %v765
  %830 = vst [vmem:[#allocation2 + $0x50] sm:$0xff] %v766
  %831 = vst [vmem:[#allocation2 + $0x58] sm:$0xff] %v767
  %832 = vst [vmem:[#allocation2 + $0x60] sm:$0xff] %v768
  %833 = vst [vmem:[#allocation2 + $0x68] sm:$0xff] %v769
  %834 = vst [vmem:[#allocation2 + $0x70] sm:$0xff] %v770
  %835 = vst [vmem:[#allocation2 + $0x78] sm:$0xff] %v771
  %836 = vst [vmem:[#allocation2 + $0x80] sm:$0xff] %v772
  %837 = vst [vmem:[#allocation2 + $0x88] sm:$0xff] %v773
  %838 = vst [vmem:[#allocation2 + $0x90] sm:$0xff] %v774
  %839 = vst [vmem:[#allocation2 + $0x98] sm:$0xff] %v775
  %840 = vst [vmem:[#allocation2 + $0xa0] sm:$0xff] %v776
  %841 = vst [vmem:[#allocation2 + $0xa8] sm:$0xff] %v777
  %842 = vst [vmem:[#allocation2 + $0xb0] sm:$0xff] %v778
  %843 = vst [vmem:[#allocation2 + $0xb8] sm:$0xff] %v779
  %844 = vst [vmem:[#allocation2 + $0xc0] sm:$0xff] %v780
  %845 = vst [vmem:[#allocation2 + $0xc8] sm:$0xff] %v781
  %846 = vst [vmem:[#allocation2 + $0xd0] sm:$0xff] %v782
  %847 = vst [vmem:[#allocation2 + $0xd8] sm:$0xff] %v783
  %848 = vst [vmem:[#allocation2 + $0xe0] sm:$0xff] %v784
  %849 = vst [vmem:[#allocation2 + $0xe8] sm:$0xff] %v785
  %850 = vst [vmem:[#allocation2 + $0xf0] sm:$0xff] %v786
  %851 = vst [vmem:[#allocation2 + $0xf8] sm:$0xff] %v787
  %852 = vst [vmem:[#allocation2 + $0x100] sm:$0xff] %v788
  %853 = vst [vmem:[#allocation2 + $0x108] sm:$0xff] %v789
  %854 = vst [vmem:[#allocation2 + $0x110] sm:$0xff] %v790
  %855 = vst [vmem:[#allocation2 + $0x118] sm:$0xff] %v791
  %856 = vst [vmem:[#allocation2 + $0x120] sm:$0xff] %v792
  %857 = vst [vmem:[#allocation2 + $0x128] sm:$0xff] %v793
  %858 = vst [vmem:[#allocation2 + $0x130] sm:$0xff] %v794
  %859 = vst [vmem:[#allocation2 + $0x138] sm:$0xff] %v795
  %860 = vst [vmem:[#allocation2 + $0x140] sm:$0xff] %v796
  %861 = vst [vmem:[#allocation2 + $0x148] sm:$0xff] %v797
  %862 = vst [vmem:[#allocation2 + $0x150] sm:$0xff] %v798
  %863 = vst [vmem:[#allocation2 + $0x158] sm:$0xff] %v799
  %864 = vst [vmem:[#allocation2 + $0x160] sm:$0xff] %v800
  %865 = vst [vmem:[#allocation2 + $0x168] sm:$0xff] %v801
  %866 = vst [vmem:[#allocation2 + $0x170] sm:$0xff] %v802
  %867 = vst [vmem:[#allocation2 + $0x178] sm:$0xff] %v803
  %868 = vst [vmem:[#allocation2 + $0x180] sm:$0xff] %v804
  %869 = vst [vmem:[#allocation2 + $0x188] sm:$0xff] %v805
  %870 = vst [vmem:[#allocation2 + $0x190] sm:$0xff] %v806
  %871 = vst [vmem:[#allocation2 + $0x198] sm:$0xff] %v807
  %872 = vst [vmem:[#allocation2 + $0x1a0] sm:$0xff] %v808
  %873 = vst [vmem:[#allocation2 + $0x1a8] sm:$0xff] %v809
  %874 = vst [vmem:[#allocation2 + $0x1b0] sm:$0xff] %v810
  %875 = vst [vmem:[#allocation2 + $0x1b8] sm:$0xff] %v811
  %876 = vst [vmem:[#allocation2 + $0x1c0] sm:$0xff] %v812
  %877 = vst [vmem:[#allocation2 + $0x1c8] sm:$0xff] %v813
  %878 = vst [vmem:[#allocation2 + $0x1d0] sm:$0xff] %v814
  %879 = vst [vmem:[#allocation2 + $0x1d8] sm:$0xff] %v815
  %880 = vst [vmem:[#allocation2 + $0x1e0] sm:$0xff] %v816
  %881 = vst [vmem:[#allocation2 + $0x1e8] sm:$0xff] %v817
  %882 = vst [vmem:[#allocation2 + $0x1f0] sm:$0xff] %v818
  %883 = vst [vmem:[#allocation2 + $0x1f8] sm:$0xff] %v819
  // Predicated region
  $region14: #{conv_bn_act.2} parent=0 // pred_check
    %p884 = pneg %p15
  $region15: #{conv_bn_act.2} parent=0 // pred_check_branch
    %886 = sbr.rel (%p884) target = $region17
  $region16: #{conv_bn_act.2} parent=0 // pred_region
    %v887 = vld [vmem:[#allocation2] sm:$0xff]
    %v888 = vld [vmem:[#allocation2 + $0x8] sm:$0xff]
    %v889 = vld [vmem:[#allocation2 + $0x10] sm:$0xff]
    %v890 = vld [vmem:[#allocation2 + $0x18] sm:$0xff]
    %v891 = vld [vmem:[#allocation2 + $0x20] sm:$0xff]
    %v892 = vld [vmem:[#allocation2 + $0x28] sm:$0xff]
    %v893 = vld [vmem:[#allocation2 + $0x30] sm:$0xff]
    %v894 = vld [vmem:[#allocation2 + $0x38] sm:$0xff]
    %v895 = vld [vmem:[#allocation2 + $0x40] sm:$0xff]
    %v896 = vld [vmem:[#allocation2 + $0x48] sm:$0xff]
    %v897 = vld [vmem:[#allocation2 + $0x50] sm:$0xff]
    %v898 = vld [vmem:[#allocation2 + $0x58] sm:$0xff]
    %v899 = vld [vmem:[#allocation2 + $0x60] sm:$0xff]
    %v900 = vld [vmem:[#allocation2 + $0x68] sm:$0xff]
    %v901 = vld [vmem:[#allocation2 + $0x70] sm:$0xff]
    %v902 = vld [vmem:[#allocation2 + $0x78] sm:$0xff]
    %v903 = vld [vmem:[#allocation2 + $0x80] sm:$0xff]
    %v904 = vld [vmem:[#allocation2 + $0x88] sm:$0xff]
    %v905 = vld [vmem:[#allocation2 + $0x90] sm:$0xff]
    %v906 = vld [vmem:[#allocation2 + $0x98] sm:$0xff]
    %v907 = vld [vmem:[#allocation2 + $0xa0] sm:$0xff]
    %v908 = vld [vmem:[#allocation2 + $0xa8] sm:$0xff]
    %v909 = vld [vmem:[#allocation2 + $0xb0] sm:$0xff]
    %v910 = vld [vmem:[#allocation2 + $0xb8] sm:$0xff]
    %v911 = vld [vmem:[#allocation2 + $0xc0] sm:$0xff]
    %v912 = vld [vmem:[#allocation2 + $0xc8] sm:$0xff]
    %v913 = vld [vmem:[#allocation2 + $0xd0] sm:$0xff]
    %v914 = vld [vmem:[#allocation2 + $0xd8] sm:$0xff]
    %v915 = vld [vmem:[#allocation2 + $0xe0] sm:$0xff]
    %v916 = vld [vmem:[#allocation2 + $0xe8] sm:$0xff]
    %v917 = vld [vmem:[#allocation2 + $0xf0] sm:$0xff]
    %v918 = vld [vmem:[#allocation2 + $0xf8] sm:$0xff]
    %v919 = vld [vmem:[#allocation2 + $0x100] sm:$0xff]
    %v920 = vld [vmem:[#allocation2 + $0x108] sm:$0xff]
    %v921 = vld [vmem:[#allocation2 + $0x110] sm:$0xff]
    %v922 = vld [vmem:[#allocation2 + $0x118] sm:$0xff]
    %v923 = vld [vmem:[#allocation2 + $0x120] sm:$0xff]
    %v924 = vld [vmem:[#allocation2 + $0x128] sm:$0xff]
    %v925 = vld [vmem:[#allocation2 + $0x130] sm:$0xff]
    %v926 = vld [vmem:[#allocation2 + $0x138] sm:$0xff]
    %v927 = vld [vmem:[#allocation2 + $0x140] sm:$0xff]
    %v928 = vld [vmem:[#allocation2 + $0x148] sm:$0xff]
    %v929 = vld [vmem:[#allocation2 + $0x150] sm:$0xff]
    %v930 = vld [vmem:[#allocation2 + $0x158] sm:$0xff]
    %v931 = vld [vmem:[#allocation2 + $0x160] sm:$0xff]
    %v932 = vld [vmem:[#allocation2 + $0x168] sm:$0xff]
    %v933 = vld [vmem:[#allocation2 + $0x170] sm:$0xff]
    %v934 = vld [vmem:[#allocation2 + $0x178] sm:$0xff]
    %v935 = vld [vmem:[#allocation2 + $0x180] sm:$0xff]
    %v936 = vld [vmem:[#allocation2 + $0x188] sm:$0xff]
    %v937 = vld [vmem:[#allocation2 + $0x190] sm:$0xff]
    %v938 = vld [vmem:[#allocation2 + $0x198] sm:$0xff]
    %v939 = vld [vmem:[#allocation2 + $0x1a0] sm:$0xff]
    %v940 = vld [vmem:[#allocation2 + $0x1a8] sm:$0xff]
    %v941 = vld [vmem:[#allocation2 + $0x1b0] sm:$0xff]
    %v942 = vld [vmem:[#allocation2 + $0x1b8] sm:$0xff]
    %v943 = vld [vmem:[#allocation2 + $0x1c0] sm:$0xff]
    %v944 = vld [vmem:[#allocation2 + $0x1c8] sm:$0xff]
    %v945 = vld [vmem:[#allocation2 + $0x1d0] sm:$0xff]
    %v946 = vld [vmem:[#allocation2 + $0x1d8] sm:$0xff]
    %v947 = vld [vmem:[#allocation2 + $0x1e0] sm:$0xff]
    %v948 = vld [vmem:[#allocation2 + $0x1e8] sm:$0xff]
    %v949 = vld [vmem:[#allocation2 + $0x1f0] sm:$0xff]
    %v950 = vld [vmem:[#allocation2 + $0x1f8] sm:$0xff]
    %v951 = vpack.c.bf16 %v888, %v887
    %v952 = vpack.c.bf16 %v890, %v889
    %v953 = vpack.c.bf16 %v892, %v891
    %v954 = vpack.c.bf16 %v894, %v893
    %v955 = vpack.c.bf16 %v896, %v895
    %v956 = vpack.c.bf16 %v898, %v897
    %v957 = vpack.c.bf16 %v900, %v899
    %v958 = vpack.c.bf16 %v902, %v901
    %v959 = vpack.c.bf16 %v904, %v903
    %v960 = vpack.c.bf16 %v906, %v905
    %v961 = vpack.c.bf16 %v908, %v907
    %v962 = vpack.c.bf16 %v910, %v909
    %v963 = vpack.c.bf16 %v912, %v911
    %v964 = vpack.c.bf16 %v914, %v913
    %v965 = vpack.c.bf16 %v916, %v915
    %v966 = vpack.c.bf16 %v918, %v917
    %v967 = vpack.c.bf16 %v920, %v919
    %v968 = vpack.c.bf16 %v922, %v921
    %v969 = vpack.c.bf16 %v924, %v923
    %v970 = vpack.c.bf16 %v926, %v925
    %v971 = vpack.c.bf16 %v928, %v927
    %v972 = vpack.c.bf16 %v930, %v929
    %v973 = vpack.c.bf16 %v932, %v931
    %v974 = vpack.c.bf16 %v934, %v933
    %v975 = vpack.c.bf16 %v936, %v935
    %v976 = vpack.c.bf16 %v938, %v937
    %v977 = vpack.c.bf16 %v940, %v939
    %v978 = vpack.c.bf16 %v942, %v941
    %v979 = vpack.c.bf16 %v944, %v943
    %v980 = vpack.c.bf16 %v946, %v945
    %v981 = vpack.c.bf16 %v948, %v947
    %v982 = vpack.c.bf16 %v950, %v949
    %v1015 = vunpack.c.l.b16 %v951
    %v1016 = vunpack.c.h.b16 %v951
    %v1017 = vunpack.c.l.b16 %v952
    %v1018 = vunpack.c.h.b16 %v952
    %v1019 = vunpack.c.l.b16 %v953
    %v1020 = vunpack.c.h.b16 %v953
    %v1021 = vunpack.c.l.b16 %v954
    %v1022 = vunpack.c.h.b16 %v954
    %v1023 = vunpack.c.l.b16 %v955
    %v1024 = vunpack.c.h.b16 %v955
    %v1025 = vunpack.c.l.b16 %v956
    %v1026 = vunpack.c.h.b16 %v956
    %v1027 = vunpack.c.l.b16 %v957
    %v1028 = vunpack.c.h.b16 %v957
    %v1029 = vunpack.c.l.b16 %v958
    %v1030 = vunpack.c.h.b16 %v958
    %v1031 = vunpack.c.l.b16 %v959
    %v1032 = vunpack.c.h.b16 %v959
    %v1033 = vunpack.c.l.b16 %v960
    %v1034 = vunpack.c.h.b16 %v960
    %v1035 = vunpack.c.l.b16 %v961
    %v1036 = vunpack.c.h.b16 %v961
    %v1037 = vunpack.c.l.b16 %v962
    %v1038 = vunpack.c.h.b16 %v962
    %v1039 = vunpack.c.l.b16 %v963
    %v1040 = vunpack.c.h.b16 %v963
    %v1041 = vunpack.c.l.b16 %v964
    %v1042 = vunpack.c.h.b16 %v964
    %v1043 = vunpack.c.l.b16 %v965
    %v1044 = vunpack.c.h.b16 %v965
    %v1045 = vunpack.c.l.b16 %v966
    %v1046 = vunpack.c.h.b16 %v966
    %v1047 = vunpack.c.l.b16 %v967
    %v1048 = vunpack.c.h.b16 %v967
    %v1049 = vunpack.c.l.b16 %v968
    %v1050 = vunpack.c.h.b16 %v968
    %v1051 = vunpack.c.l.b16 %v969
    %v1052 = vunpack.c.h.b16 %v969
    %v1053 = vunpack.c.l.b16 %v970
    %v1054 = vunpack.c.h.b16 %v970
    %v1055 = vunpack.c.l.b16 %v971
    %v1056 = vunpack.c.h.b16 %v971
    %v1057 = vunpack.c.l.b16 %v972
    %v1058 = vunpack.c.h.b16 %v972
    %v1059 = vunpack.c.l.b16 %v973
    %v1060 = vunpack.c.h.b16 %v973
    %v1061 = vunpack.c.l.b16 %v974
    %v1062 = vunpack.c.h.b16 %v974
    %v1063 = vunpack.c.l.b16 %v975
    %v1064 = vunpack.c.h.b16 %v975
    %v1065 = vunpack.c.l.b16 %v976
    %v1066 = vunpack.c.h.b16 %v976
    %v1067 = vunpack.c.l.b16 %v977
    %v1068 = vunpack.c.h.b16 %v977
    %v1069 = vunpack.c.l.b16 %v978
    %v1070 = vunpack.c.h.b16 %v978
    %v1071 = vunpack.c.l.b16 %v979
    %v1072 = vunpack.c.h.b16 %v979
    %v1073 = vunpack.c.l.b16 %v980
    %v1074 = vunpack.c.h.b16 %v980
    %v1075 = vunpack.c.l.b16 %v981
    %v1076 = vunpack.c.h.b16 %v981
    %v1077 = vunpack.c.l.b16 %v982
    %v1078 = vunpack.c.h.b16 %v982
    %v1079 = vpack.c.b16 %v1015, %v1015
    %v1080 = vpack.c.b16 %v1016, %v1016
    %v1081 = vpack.c.b16 %v1017, %v1017
    %v1082 = vpack.c.b16 %v1018, %v1018
    %v1083 = vpack.c.b16 %v1019, %v1019
    %v1084 = vpack.c.b16 %v1020, %v1020
    %v1085 = vpack.c.b16 %v1021, %v1021
    %v1086 = vpack.c.b16 %v1022, %v1022
    %v1087 = vpack.c.b16 %v1023, %v1023
    %v1088 = vpack.c.b16 %v1024, %v1024
    %v1089 = vpack.c.b16 %v1025, %v1025
    %v1090 = vpack.c.b16 %v1026, %v1026
    %v1091 = vpack.c.b16 %v1027, %v1027
    %v1092 = vpack.c.b16 %v1028, %v1028
    %v1093 = vpack.c.b16 %v1029, %v1029
    %v1094 = vpack.c.b16 %v1030, %v1030
    %v1095 = vpack.c.b16 %v1031, %v1031
    %v1096 = vpack.c.b16 %v1032, %v1032
    %v1097 = vpack.c.b16 %v1033, %v1033
    %v1098 = vpack.c.b16 %v1034, %v1034
    %v1099 = vpack.c.b16 %v1035, %v1035
    %v1100 = vpack.c.b16 %v1036, %v1036
    %v1101 = vpack.c.b16 %v1037, %v1037
    %v1102 = vpack.c.b16 %v1038, %v1038
    %v1103 = vpack.c.b16 %v1039, %v1039
    %v1104 = vpack.c.b16 %v1040, %v1040
    %v1105 = vpack.c.b16 %v1041, %v1041
    %v1106 = vpack.c.b16 %v1042, %v1042
    %v1107 = vpack.c.b16 %v1043, %v1043
    %v1108 = vpack.c.b16 %v1044, %v1044
    %v1109 = vpack.c.b16 %v1045, %v1045
    %v1110 = vpack.c.b16 %v1046, %v1046
    %v1111 = vpack.c.b16 %v1047, %v1047
    %v1112 = vpack.c.b16 %v1048, %v1048
    %v1113 = vpack.c.b16 %v1049, %v1049
    %v1114 = vpack.c.b16 %v1050, %v1050
    %v1115 = vpack.c.b16 %v1051, %v1051
    %v1116 = vpack.c.b16 %v1052, %v1052
    %v1117 = vpack.c.b16 %v1053, %v1053
    %v1118 = vpack.c.b16 %v1054, %v1054
    %v1119 = vpack.c.b16 %v1055, %v1055
    %v1120 = vpack.c.b16 %v1056, %v1056
    %v1121 = vpack.c.b16 %v1057, %v1057
    %v1122 = vpack.c.b16 %v1058, %v1058
    %v1123 = vpack.c.b16 %v1059, %v1059
    %v1124 = vpack.c.b16 %v1060, %v1060
    %v1125 = vpack.c.b16 %v1061, %v1061
    %v1126 = vpack.c.b16 %v1062, %v1062
    %v1127 = vpack.c.b16 %v1063, %v1063
    %v1128 = vpack.c.b16 %v1064, %v1064
    %v1129 = vpack.c.b16 %v1065, %v1065
    %v1130 = vpack.c.b16 %v1066, %v1066
    %v1131 = vpack.c.b16 %v1067, %v1067
    %v1132 = vpack.c.b16 %v1068, %v1068
    %v1133 = vpack.c.b16 %v1069, %v1069
    %v1134 = vpack.c.b16 %v1070, %v1070
    %v1135 = vpack.c.b16 %v1071, %v1071
    %v1136 = vpack.c.b16 %v1072, %v1072
    %v1137 = vpack.c.b16 %v1073, %v1073
    %v1138 = vpack.c.b16 %v1074, %v1074
    %v1139 = vpack.c.b16 %v1075, %v1075
    %v1140 = vpack.c.b16 %v1076, %v1076
    %v1141 = vpack.c.b16 %v1077, %v1077
    %v1142 = vpack.c.b16 %v1078, %v1078
    %1207 = vst [vmem:[%s2] sm:$0xf] %v1079
    %1208 = vst [vmem:[%s2 + $0x4] sm:$0xf] %v1080
    %1209 = vst [vmem:[%s2 + $0x8] sm:$0xf] %v1081
    %1210 = vst [vmem:[%s2 + $0xc] sm:$0xf] %v1082
    %1211 = vst [vmem:[%s2 + $0x10] sm:$0xf] %v1083
    %1212 = vst [vmem:[%s2 + $0x14] sm:$0xf] %v1084
    %1213 = vst [vmem:[%s2 + $0x18] sm:$0xf] %v1085
    %1214 = vst [vmem:[%s2 + $0x1c] sm:$0xf] %v1086
    %1215 = vst [vmem:[%s2 + $0x20] sm:$0xf] %v1087
    %1216 = vst [vmem:[%s2 + $0x24] sm:$0xf] %v1088
    %1217 = vst [vmem:[%s2 + $0x28] sm:$0xf] %v1089
    %1218 = vst [vmem:[%s2 + $0x2c] sm:$0xf] %v1090
    %1219 = vst [vmem:[%s2 + $0x30] sm:$0xf] %v1091
    %1220 = vst [vmem:[%s2 + $0x34] sm:$0xf] %v1092
    %1221 = vst [vmem:[%s2 + $0x38] sm:$0xf] %v1093
    %1222 = vst [vmem:[%s2 + $0x3c] sm:$0xf] %v1094
    %1223 = vst [vmem:[%s2 + $0x40] sm:$0xf] %v1095
    %1224 = vst [vmem:[%s2 + $0x44] sm:$0xf] %v1096
    %1225 = vst [vmem:[%s2 + $0x48] sm:$0xf] %v1097
    %1226 = vst [vmem:[%s2 + $0x4c] sm:$0xf] %v1098
    %1227 = vst [vmem:[%s2 + $0x50] sm:$0xf] %v1099
    %1228 = vst [vmem:[%s2 + $0x54] sm:$0xf] %v1100
    %1229 = vst [vmem:[%s2 + $0x58] sm:$0xf] %v1101
    %1230 = vst [vmem:[%s2 + $0x5c] sm:$0xf] %v1102
    %1231 = vst [vmem:[%s2 + $0x60] sm:$0xf] %v1103
    %1232 = vst [vmem:[%s2 + $0x64] sm:$0xf] %v1104
    %1233 = vst [vmem:[%s2 + $0x68] sm:$0xf] %v1105
    %1234 = vst [vmem:[%s2 + $0x6c] sm:$0xf] %v1106
    %1235 = vst [vmem:[%s2 + $0x70] sm:$0xf] %v1107
    %1236 = vst [vmem:[%s2 + $0x74] sm:$0xf] %v1108
    %1237 = vst [vmem:[%s2 + $0x78] sm:$0xf] %v1109
    %1238 = vst [vmem:[%s2 + $0x7c] sm:$0xf] %v1110
    %1239 = vst [vmem:[%s2 + $0x80] sm:$0xf] %v1111
    %1240 = vst [vmem:[%s2 + $0x84] sm:$0xf] %v1112
    %1241 = vst [vmem:[%s2 + $0x88] sm:$0xf] %v1113
    %1242 = vst [vmem:[%s2 + $0x8c] sm:$0xf] %v1114
    %1243 = vst [vmem:[%s2 + $0x90] sm:$0xf] %v1115
    %1244 = vst [vmem:[%s2 + $0x94] sm:$0xf] %v1116
    %1245 = vst [vmem:[%s2 + $0x98] sm:$0xf] %v1117
    %1246 = vst [vmem:[%s2 + $0x9c] sm:$0xf] %v1118
    %1247 = vst [vmem:[%s2 + $0xa0] sm:$0xf] %v1119
    %1248 = vst [vmem:[%s2 + $0xa4] sm:$0xf] %v1120
    %1249 = vst [vmem:[%s2 + $0xa8] sm:$0xf] %v1121
    %1250 = vst [vmem:[%s2 + $0xac] sm:$0xf] %v1122
    %1251 = vst [vmem:[%s2 + $0xb0] sm:$0xf] %v1123
    %1252 = vst [vmem:[%s2 + $0xb4] sm:$0xf] %v1124
    %1253 = vst [vmem:[%s2 + $0xb8] sm:$0xf] %v1125
    %1254 = vst [vmem:[%s2 + $0xbc] sm:$0xf] %v1126
    %1255 = vst [vmem:[%s2 + $0xc0] sm:$0xf] %v1127
    %1256 = vst [vmem:[%s2 + $0xc4] sm:$0xf] %v1128
    %1257 = vst [vmem:[%s2 + $0xc8] sm:$0xf] %v1129
    %1258 = vst [vmem:[%s2 + $0xcc] sm:$0xf] %v1130
    %1259 = vst [vmem:[%s2 + $0xd0] sm:$0xf] %v1131
    %1260 = vst [vmem:[%s2 + $0xd4] sm:$0xf] %v1132
    %1261 = vst [vmem:[%s2 + $0xd8] sm:$0xf] %v1133
    %1262 = vst [vmem:[%s2 + $0xdc] sm:$0xf] %v1134
    %1263 = vst [vmem:[%s2 + $0xe0] sm:$0xf] %v1135
    %1264 = vst [vmem:[%s2 + $0xe4] sm:$0xf] %v1136
    %1265 = vst [vmem:[%s2 + $0xe8] sm:$0xf] %v1137
    %1266 = vst [vmem:[%s2 + $0xec] sm:$0xf] %v1138
    %1267 = vst [vmem:[%s2 + $0xf0] sm:$0xf] %v1139
    %1268 = vst [vmem:[%s2 + $0xf4] sm:$0xf] %v1140
    %1269 = vst [vmem:[%s2 + $0xf8] sm:$0xf] %v1141
    %1270 = vst [vmem:[%s2 + $0xfc] sm:$0xf] %v1142
    %v1271 = vadd.f32 %v887, %v888
    %v1272 = vadd.f32 %v1271, %v889
    %v1273 = vadd.f32 %v1272, %v890
    %v1274 = vadd.f32 %v1273, %v891
    %v1275 = vadd.f32 %v1274, %v892
    %v1276 = vadd.f32 %v1275, %v893
    %v1277 = vadd.f32 %v1276, %v894
    %v1278 = vadd.f32 %v1277, %v895
    %v1279 = vadd.f32 %v1278, %v896
    %v1280 = vadd.f32 %v1279, %v897
    %v1281 = vadd.f32 %v1280, %v898
    %v1282 = vadd.f32 %v1281, %v899
    %v1283 = vadd.f32 %v1282, %v900
    %v1284 = vadd.f32 %v1283, %v901
    %v1285 = vadd.f32 %v1284, %v902
    %v1286 = vadd.f32 %v1285, %v903
    %v1287 = vadd.f32 %v1286, %v904
    %v1288 = vadd.f32 %v1287, %v905
    %v1289 = vadd.f32 %v1288, %v906
    %v1290 = vadd.f32 %v1289, %v907
    %v1291 = vadd.f32 %v1290, %v908
    %v1292 = vadd.f32 %v1291, %v909
    %v1293 = vadd.f32 %v1292, %v910
    %v1294 = vadd.f32 %v1293, %v911
    %v1295 = vadd.f32 %v1294, %v912
    %v1296 = vadd.f32 %v1295, %v913
    %v1297 = vadd.f32 %v1296, %v914
    %v1298 = vadd.f32 %v1297, %v915
    %v1299 = vadd.f32 %v1298, %v916
    %v1300 = vadd.f32 %v1299, %v917
    %v1301 = vadd.f32 %v1300, %v918
    %v1302 = vadd.f32 %v1301, %v919
    %v1303 = vadd.f32 %v1302, %v920
    %v1304 = vadd.f32 %v1303, %v921
    %v1305 = vadd.f32 %v1304, %v922
    %v1306 = vadd.f32 %v1305, %v923
    %v1307 = vadd.f32 %v1306, %v924
    %v1308 = vadd.f32 %v1307, %v925
    %v1309 = vadd.f32 %v1308, %v926
    %v1310 = vadd.f32 %v1309, %v927
    %v1311 = vadd.f32 %v1310, %v928
    %v1312 = vadd.f32 %v1311, %v929
    %v1313 = vadd.f32 %v1312, %v930
    %v1314 = vadd.f32 %v1313, %v931
    %v1315 = vadd.f32 %v1314, %v932
    %v1316 = vadd.f32 %v1315, %v933
    %v1317 = vadd.f32 %v1316, %v934
    %v1318 = vadd.f32 %v1317, %v935
    %v1319 = vadd.f32 %v1318, %v936
    %v1320 = vadd.f32 %v1319, %v937
    %v1321 = vadd.f32 %v1320, %v938
    %v1322 = vadd.f32 %v1321, %v939
    %v1323 = vadd.f32 %v1322, %v940
    %v1324 = vadd.f32 %v1323, %v941
    %v1325 = vadd.f32 %v1324, %v942
    %v1326 = vadd.f32 %v1325, %v943
    %v1327 = vadd.f32 %v1326, %v944
    %v1328 = vadd.f32 %v1327, %v945
    %v1329 = vadd.f32 %v1328, %v946
    %v1330 = vadd.f32 %v1329, %v947
    %v1331 = vadd.f32 %v1330, %v948
    %v1332 = vadd.f32 %v1331, %v949
    %v1333 = vadd.f32 %v1332, %v950
    %v1334 = vrot.slane %v1333, 4
    %v1335 = vadd.f32 %v1333, %v1334
    %v1336 = vrot.slane %v1335, 2
    %v1337 = vadd.f32 %v1335, %v1336
    %v1338 = vrot.slane %v1337, 1
    %v1339 = vadd.f32 %v1337, %v1338
    %v1340 = vmul.f32 %v887, %v887
    %v1341 = vmul.f32 %v888, %v888
    %v1342 = vmul.f32 %v889, %v889
    %v1343 = vmul.f32 %v890, %v890
    %v1344 = vmul.f32 %v891, %v891
    %v1345 = vmul.f32 %v892, %v892
    %v1346 = vmul.f32 %v893, %v893
    %v1347 = vmul.f32 %v894, %v894
    %v1348 = vmul.f32 %v895, %v895
    %v1349 = vmul.f32 %v896, %v896
    %v1350 = vmul.f32 %v897, %v897
    %v1351 = vmul.f32 %v898, %v898
    %v1352 = vmul.f32 %v899, %v899
    %v1353 = vmul.f32 %v900, %v900
    %v1354 = vmul.f32 %v901, %v901
    %v1355 = vmul.f32 %v902, %v902
    %v1356 = vmul.f32 %v903, %v903
    %v1357 = vmul.f32 %v904, %v904
    %v1358 = vmul.f32 %v905, %v905
    %v1359 = vmul.f32 %v906, %v906
    %v1360 = vmul.f32 %v907, %v907
    %v1361 = vmul.f32 %v908, %v908
    %v1362 = vmul.f32 %v909, %v909
    %v1363 = vmul.f32 %v910, %v910
    %v1364 = vmul.f32 %v911, %v911
    %v1365 = vmul.f32 %v912, %v912
    %v1366 = vmul.f32 %v913, %v913
    %v1367 = vmul.f32 %v914, %v914
    %v1368 = vmul.f32 %v915, %v915
    %v1369 = vmul.f32 %v916, %v916
    %v1370 = vmul.f32 %v917, %v917
    %v1371 = vmul.f32 %v918, %v918
    %v1372 = vmul.f32 %v919, %v919
    %v1373 = vmul.f32 %v920, %v920
    %v1374 = vmul.f32 %v921, %v921
    %v1375 = vmul.f32 %v922, %v922
    %v1376 = vmul.f32 %v923, %v923
    %v1377 = vmul.f32 %v924, %v924
    %v1378 = vmul.f32 %v925, %v925
    %v1379 = vmul.f32 %v926, %v926
    %v1380 = vmul.f32 %v927, %v927
    %v1381 = vmul.f32 %v928, %v928
    %v1382 = vmul.f32 %v929, %v929
    %v1383 = vmul.f32 %v930, %v930
    %v1384 = vmul.f32 %v931, %v931
    %v1385 = vmul.f32 %v932, %v932
    %v1386 = vmul.f32 %v933, %v933
    %v1387 = vmul.f32 %v934, %v934
    %v1388 = vmul.f32 %v935, %v935
    %v1389 = vmul.f32 %v936, %v936
    %v1390 = vmul.f32 %v937, %v937
    %v1391 = vmul.f32 %v938, %v938
    %v1392 = vmul.f32 %v939, %v939
    %v1393 = vmul.f32 %v940, %v940
    %v1394 = vmul.f32 %v941, %v941
    %v1395 = vmul.f32 %v942, %v942
    %v1396 = vmul.f32 %v943, %v943
    %v1397 = vmul.f32 %v944, %v944
    %v1398 = vmul.f32 %v945, %v945
    %v1399 = vmul.f32 %v946, %v946
    %v1400 = vmul.f32 %v947, %v947
    %v1401 = vmul.f32 %v948, %v948
    %v1402 = vmul.f32 %v949, %v949
    %v1403 = vmul.f32 %v950, %v950
    %v1404 = vadd.f32 %v1340, %v1341
    %v1405 = vadd.f32 %v1404, %v1342
    %v1406 = vadd.f32 %v1405, %v1343
    %v1407 = vadd.f32 %v1406, %v1344
    %v1408 = vadd.f32 %v1407, %v1345
    %v1409 = vadd.f32 %v1408, %v1346
    %v1410 = vadd.f32 %v1409, %v1347
    %v1411 = vadd.f32 %v1410, %v1348
    %v1412 = vadd.f32 %v1411, %v1349
    %v1413 = vadd.f32 %v1412, %v1350
    %v1414 = vadd.f32 %v1413, %v1351
    %v1415 = vadd.f32 %v1414, %v1352
    %v1416 = vadd.f32 %v1415, %v1353
    %v1417 = vadd.f32 %v1416, %v1354
    %v1418 = vadd.f32 %v1417, %v1355
    %v1419 = vadd.f32 %v1418, %v1356
    %v1420 = vadd.f32 %v1419, %v1357
    %v1421 = vadd.f32 %v1420, %v1358
    %v1422 = vadd.f32 %v1421, %v1359
    %v1423 = vadd.f32 %v1422, %v1360
    %v1424 = vadd.f32 %v1423, %v1361
    %v1425 = vadd.f32 %v1424, %v1362
    %v1426 = vadd.f32 %v1425, %v1363
    %v1427 = vadd.f32 %v1426, %v1364
    %v1428 = vadd.f32 %v1427, %v1365
    %v1429 = vadd.f32 %v1428, %v1366
    %v1430 = vadd.f32 %v1429, %v1367
    %v1431 = vadd.f32 %v1430, %v1368
    %v1432 = vadd.f32 %v1431, %v1369
    %v1433 = vadd.f32 %v1432, %v1370
    %v1434 = vadd.f32 %v1433, %v1371
    %v1435 = vadd.f32 %v1434, %v1372
    %v1436 = vadd.f32 %v1435, %v1373
    %v1437 = vadd.f32 %v1436, %v1374
    %v1438 = vadd.f32 %v1437, %v1375
    %v1439 = vadd.f32 %v1438, %v1376
    %v1440 = vadd.f32 %v1439, %v1377
    %v1441 = vadd.f32 %v1440, %v1378
    %v1442 = vadd.f32 %v1441, %v1379
    %v1443 = vadd.f32 %v1442, %v1380
    %v1444 = vadd.f32 %v1443, %v1381
    %v1445 = vadd.f32 %v1444, %v1382
    %v1446 = vadd.f32 %v1445, %v1383
    %v1447 = vadd.f32 %v1446, %v1384
    %v1448 = vadd.f32 %v1447, %v1385
    %v1449 = vadd.f32 %v1448, %v1386
    %v1450 = vadd.f32 %v1449, %v1387
    %v1451 = vadd.f32 %v1450, %v1388
    %v1452 = vadd.f32 %v1451, %v1389
    %v1453 = vadd.f32 %v1452, %v1390
    %v1454 = vadd.f32 %v1453, %v1391
    %v1455 = vadd.f32 %v1454, %v1392
    %v1456 = vadd.f32 %v1455, %v1393
    %v1457 = vadd.f32 %v1456, %v1394
    %v1458 = vadd.f32 %v1457, %v1395
    %v1459 = vadd.f32 %v1458, %v1396
    %v1460 = vadd.f32 %v1459, %v1397
    %v1461 = vadd.f32 %v1460, %v1398
    %v1462 = vadd.f32 %v1461, %v1399
    %v1463 = vadd.f32 %v1462, %v1400
    %v1464 = vadd.f32 %v1463, %v1401
    %v1465 = vadd.f32 %v1464, %v1402
    %v1466 = vadd.f32 %v1465, %v1403
    %v1467 = vrot.slane %v1466, 4
    %v1468 = vadd.f32 %v1466, %v1467
    %v1469 = vrot.slane %v1468, 2
    %v1470 = vadd.f32 %v1468, %v1469
    %v1471 = vrot.slane %v1470, 1
    %v1472 = vadd.f32 %v1470, %v1471
    %1473 = vst [vmem:[%s3] sm:$0xff] %v1339
    %1474 = vst [vmem:[%s4] sm:$0xff] %v1472
  $region17: #{conv_bn_act.2} parent=0 // pred_fallthru
    _
  // Predicated region
  $region18: #{conv_bn_act.2} parent=0 // pred_check
    _
  $region19: #{conv_bn_act.2} parent=0 // pred_check_branch
    %1476 = sbr.rel (0) target = $region21
  $region20: #{conv_bn_act.2} parent=0 // pred_region
    _
  $region21: #{conv_bn_act.2} parent=0 // pred_fallthru
    _
  // Predicated region
  $region22: #{conv_bn_act.2} parent=0 // pred_check
    _
  $region23: #{conv_bn_act.2} parent=0 // pred_check_branch
    %1478 = sbr.rel (0) target = $region25
  $region24: #{conv_bn_act.2} parent=0 // pred_region
    _
  $region25: #{conv_bn_act.2} parent=0 // pred_fallthru
    _
  // Predicated region
  $region26: #{conv_bn_act.2} parent=0 // pred_check
    _
  $region27: #{conv_bn_act.2} parent=0 // pred_check_branch
    %1480 = sbr.rel (0) target = $region29
  $region28: #{conv_bn_act.2} parent=0 // pred_region
    _
  $region29: #{conv_bn_act.2} parent=0 // pred_fallthru
    _
  // Predicated region
  $region30: #{conv_bn_act.2} parent=0 // pred_check
    _
  $region31: #{conv_bn_act.2} parent=0 // pred_check_branch
    %1482 = sbr.rel (0) target = $region33
  $region32: #{conv_bn_act.2} parent=0 // pred_region
    _
  $region33: #{conv_bn_act.2} parent=0 // pred_fallthru
    _
  // Predicated region
  $region34: #{conv_bn_act.2} parent=0 // pred_check
    _
  $region35: #{conv_bn_act.2} parent=0 // pred_check_branch
    %1484 = sbr.rel (0) target = $region37
  $region36: #{conv_bn_act.2} parent=0 // pred_region
    _
  $region37: #{conv_bn_act.2} parent=0 // pred_fallthru
    _
  // Predicated region
  $region38: #{conv_bn_act.2} parent=0 // pred_check
    _
  $region39: #{conv_bn_act.2} parent=0 // pred_check_branch
    %1486 = sbr.rel (0) target = $region41
  $region40: #{conv_bn_act.2} parent=0 // pred_region
    _
  $region41: #{conv_bn_act.2} parent=0 // pred_fallthru
    _

</llo_original>
